<compile_context>
chip_gen: v5e
topology: v5e:2x2
jax: 0.10.0
libtpu: 0.0.40
codegen_flags: <defaults>
</compile_context>

<pallas_src>
import jax
import jax.numpy as jnp
from jax.experimental import pallas as pl
from jax.experimental.pallas import tpu as pltpu

VOCAB_SIZE = 50
EMBED_SIZE = 16
HIDDEN = 16        # word_gru_hidden_num
MAX_WORDS = 8      # tokens per sentence
BATCH = 2          # sentences


# --------------------------------------------------------------------------
# Fused kernel: BiGRU recurrence + word attention.
# --------------------------------------------------------------------------
def _han_word_kernel(emb_ref, h0_ref, wx_ref, bx_ref, wh_ref, bh_ref,
                     ww_ref, bw_ref, pw_ref,
                     sent_ref, hn_ref, attn_ref, ow_ref):
    TB2, _ = emb_ref.shape          # (T*2B, E): row r = t*2B + j, j<B -> fwd
    _, B, H = h0_ref.shape          # (2, B, H)
    B2 = 2 * B
    T = TB2 // B2
    H2, H3 = 2 * H, 3 * H
    f32 = jnp.float32

    # Row-direction mask for any (2B, ...) block: rows 0:B fwd, B:2B bwd.
    is_fwd = jax.lax.broadcasted_iota(jnp.int32, (B2, 1), 0) < B

    # ---- Up-front input projection for all timesteps & both directions -----
    # One big MXU pass; direction columns selected once, pre-sliced per step.
    # All of this sits OFF the recurrence critical path.
    gi6 = jnp.dot(emb_ref[...], wx_ref[...],
                  preferred_element_type=f32) + bx_ref[...]          # (T*2B, 6H)
    gi_rz = []
    gi_n = []
    for t in range(T):
        blk = gi6[t * B2:(t + 1) * B2, :]                            # (2B, 6H)
        sel = jnp.where(is_fwd, blk[:, :H3], blk[:, H3:])            # (2B, 3H)
        gi_rz.append(sel[:, :H2])                                    # r|z input+bias
        gi_n.append(sel[:, H2:])                                     # n input+bias

    # ---- Recurrence: single (2B, H) state block, hidden contraction only ---
    h = jnp.concatenate([h0_ref[0], h0_ref[1]], axis=0)              # (2B, H)
    wh = wh_ref[...]                                                 # (H, 6H)
    bh = bh_ref[...]                                                 # (1, 6H): [0,0,b_hn_f | 0,0,b_hn_b]

    for t in range(T):   # fully unrolled: static addresses, scheduler freedom
        g6 = jnp.dot(h, wh, preferred_element_type=f32) + bh         # (2B, 6H)
        gh = jnp.where(is_fwd, g6[:, :H3], g6[:, H3:])               # (2B, 3H)
        rz = jax.nn.sigmoid(gi_rz[t] + gh[:, :H2])                   # 1 EUP sigmoid / step
        r = rz[:, :H]
        z = rz[:, H:]
        n = jnp.tanh(gi_n[t] + r * gh[:, H2:])                       # 1 EUP tanh / step
        h = n + z * (h - n)                                          # == (1-z)*n + z*h
        # Scatter into time-major output scratch (off the dependency chain).
        ow_ref[t * B:(t + 1) * B, :H] = h[:B, :]                     # fwd hidden @ time t
        ow_ref[(T - 1 - t) * B:(T - t) * B, H:] = h[B:, :]           # bwd hidden @ time T-1-t

    hn_ref[0] = h[:B, :]
    hn_ref[1] = h[B:, :]

    # ---- Word attention: fully batched over all (sentence, token) rows -----
    x = ow_ref[...]                                                  # (T*B, 2H); row = t*B + b
    u = jnp.tanh(jnp.dot(x, ww_ref[...], preferred_element_type=f32) + bw_ref[...])
    logits = jnp.dot(u, pw_ref[...], preferred_element_type=f32)     # (T*B, 1)
    m = jnp.max(logits, axis=0, keepdims=True)                       # global max (stable)
    e = jnp.exp(logits - m)                                          # (T*B, 1)

    TB = T * B
    # Constant 0/1 selection matrices (iota+compare only; no reshape/transpose):
    #   sel_b[b, r] = 1 iff row r belongs to sentence b  (r % B == b)
    #   sel_t[r, t] = 1 iff row r belongs to token t     (r // B == t)
    eye_b = (jax.lax.broadcasted_iota(jnp.int32, (B, B), 0) ==
             jax.lax.broadcasted_iota(jnp.int32, (B, B), 1)).astype(f32)
    sel_b = jnp.concatenate([eye_b] * T, axis=1)                     # (B, T*B)
    r_idx = jax.lax.broadcasted_iota(jnp.int32, (TB, T), 0)
    t_idx = jax.lax.broadcasted_iota(jnp.int32, (TB, T), 1)
    sel_t = ((r_idx >= t_idx * B) & (r_idx < (t_idx + 1) * B)).astype(f32)   # (T*B, T)

    attn_un = jnp.dot(sel_b, e * sel_t, preferred_element_type=f32)  # (B, T) un-normalized
    sent_un = jnp.dot(sel_b, e * x, preferred_element_type=f32)      # (B, 2H) un-normalized
    inv = pl.reciprocal(jnp.sum(attn_un, axis=1, keepdims=True), approx=True)   # (B, 1)
    attn_ref[...] = attn_un * inv
    sent_ref[...] = sent_un * inv


# --------------------------------------------------------------------------
# Parameter fusion — run ONCE at init, outside the per-call jitted forward.
# --------------------------------------------------------------------------
def prepare_params(params):
    H = params["whh_f"].shape[1]

    def one_dir(wih, whh, bih, bhh):
        wx = wih.T                                                   # (E, 3H) cols [r|z|n]
        wh = whh.T                                                   # (H, 3H)
        bx = jnp.concatenate([bih[:2 * H] + bhh[:2 * H], bih[2 * H:]], axis=0)   # (3H,)
        bh = jnp.concatenate([jnp.zeros((2 * H,), jnp.float32), bhh[2 * H:]], axis=0)
        return wx, wh, bx, bh

    wxf, whf, bxf, bhf = one_dir(params["wih_f"], params["whh_f"],
                                 params["bih_f"], params["bhh_f"])
    wxb, whb, bxb, bhb = one_dir(params["wih_b"], params["whh_b"],
                                 params["bih_b"], params["bhh_b"])
    return {
        "emb": params["emb"],
        "wx": jnp.concatenate([wxf, wxb], axis=1),                   # (E, 6H)
        "bx": jnp.concatenate([bxf, bxb], axis=0)[None, :],          # (1, 6H)
        "wh": jnp.concatenate([whf, whb], axis=1),                   # (H, 6H)
        "bh": jnp.concatenate([bhf, bhb], axis=0)[None, :],          # (1, 6H)
        "ww": params["w_word"],                                      # (2H, 2H)
        "bw": params["b_word"][None, :],                             # (1, 2H)
        "pw": params["proj_word"],                                   # (2H, 1)
    }


# --------------------------------------------------------------------------
# Forward pass: embedding lookup + single fused Pallas kernel.
# --------------------------------------------------------------------------
@jax.jit
def attention_word_rnn_forward(input_ids, state_word, fused):
    B, T = input_ids.shape
    H = state_word.shape[-1]

    # TODO(synk): embedding gather stays in plain JAX (a DMA gather kernel is
    # unnecessary at this scale).  Columns 0:B are the forward stream (time t),
    # columns B:2B the backward stream (time T-1-t), so the kernel never has
    # to reverse or re-concatenate anything.
    ids_tb = input_ids.T                                             # (T, B)
    ids_comb = jnp.concatenate([ids_tb, ids_tb[::-1]], axis=1)       # (T, 2B)
    emb_comb = jnp.take(fused["emb"], ids_comb.reshape(-1), axis=0)  # (T*2B, E)

    vmem = pl.BlockSpec(memory_space=pltpu.MemorySpace.VMEM)
    sent, hn, attn = pl.pallas_call(
        _han_word_kernel,
        out_shape=(
            jax.ShapeDtypeStruct((B, 2 * H), jnp.float32),           # sent_vectors
            jax.ShapeDtypeStruct((2, B, H), jnp.float32),            # final GRU state
            jax.ShapeDtypeStruct((B, T), jnp.float32),               # attention (B, T)
        ),
        in_specs=[vmem] * 9,
        out_specs=(vmem, vmem, vmem),
        scratch_shapes=[pltpu.VMEM((T * B, 2 * H), jnp.float32)],    # output_word scratch
    )(emb_comb, state_word, fused["wx"], fused["bx"], fused["wh"], fused["bh"],
      fused["ww"], fused["bw"], fused["pw"])
    return sent, hn, attn


# --------------------------------------------------------------------------
# Pure-JAX reference (same math, no Pallas) for a correctness check.
# --------------------------------------------------------------------------
def reference_forward(input_ids, state_word, params):
    embedded = jnp.take(params["emb"], input_ids, axis=0)
    B, T, _ = embedded.shape
    H = state_word.shape[-1]

    def cell(x, h, wih, whh, bih, bhh):
        gi = x @ wih.T + bih
        gh = h @ whh.T + bhh
        r = jax.nn.sigmoid(gi[:, :H] + gh[:, :H])
        z = jax.nn.sigmoid(gi[:, H:2 * H] + gh[:, H:2 * H])
        n = jnp.tanh(gi[:, 2 * H:] + r * gh[:, 2 * H:])
        return (1.0 - z) * n + z * h

    h_f, h_b = state_word[0], state_word[1]
    outs_f, outs_b = [], [None] * T
    for t in range(T):
        h_f = cell(embedded[:, t], h_f, params["wih_f"], params["whh_f"],
                   params["bih_f"], params["bhh_f"])
        outs_f.append(h_f)
        tb = T - 1 - t
        h_b = cell(embedded[:, tb], h_b, params["wih_b"], params["whh_b"],
                   params["bih_b"], params["bhh_b"])
        outs_b[tb] = h_b
    output_word = jnp.concatenate(
        [jnp.stack(outs_f, axis=1), jnp.stack(outs_b, axis=1)], axis=-1)
    state_out = jnp.stack([h_f, h_b], axis=0)

    u = jnp.tanh(output_word @ params["w_word"] + params["b_word"])
    logits = jnp.squeeze(u @ params["proj_word"], axis=-1)
    attn = jax.nn.softmax(logits, axis=1)
    sent = jnp.sum(attn[..., None] * output_word, axis=1)
    return sent, state_out, attn


def make_params(key):
    ks = jax.random.split(key, 12)
    u = lambda k, shape, s=0.1: jax.random.uniform(k, shape, jnp.float32, -s, s)
    H, E = HIDDEN, EMBED_SIZE
    return {
        "emb": u(ks[0], (VOCAB_SIZE, E)),
        "wih_f": u(ks[1], (3 * H, E)), "whh_f": u(ks[2], (3 * H, H)),
        "bih_f": u(ks[3], (3 * H,)),   "bhh_f": u(ks[4], (3 * H,)),
        "wih_b": u(ks[5], (3 * H, E)), "whh_b": u(ks[6], (3 * H, H)),
        "bih_b": u(ks[7], (3 * H,)),   "bhh_b": u(ks[8], (3 * H,)),
        "w_word": u(ks[9], (2 * H, 2 * H)),
        "b_word": u(ks[10], (2 * H,)),
        "proj_word": u(ks[11], (2 * H, 1)),
    }


if __name__ == "__main__":
    key = jax.random.PRNGKey(0)
    k_params, k_ids, k_state = jax.random.split(key, 3)
    params = make_params(k_params)
    input_ids = jax.random.randint(k_ids, (BATCH, MAX_WORDS), 0, VOCAB_SIZE, jnp.int32)
    state_word = jax.random.normal(k_state, (2, BATCH, HIDDEN), jnp.float32)

    fused = prepare_params(params)        # one-time parameter fusion (hoisted)

    sent, state_out, attn = jax.block_until_ready(
        attention_word_rnn_forward(input_ids, state_word, fused))

    sent_r, state_r, attn_r = reference_forward(input_ids, state_word, params)
    assert sent.shape == (BATCH, 2 * HIDDEN)
    assert state_out.shape == (2, BATCH, HIDDEN)
    assert attn.shape == (BATCH, MAX_WORDS)
    # 2e-3 tolerance: the approx reciprocal in the softmax denominator adds a
    # ~1e-4-level relative error on top of fp reassociation; real bugs are >>.
    assert jnp.allclose(sent, sent_r, rtol=2e-3, atol=2e-3)
    assert jnp.allclose(state_out, state_r, rtol=2e-3, atol=2e-3)
    assert jnp.allclose(attn, attn_r, rtol=2e-3, atol=2e-3)

    print("KERNEL_OK")
</pallas_src>

<mosaic_0001>
module attributes {stable_mosaic.version = 11 : i64} {
  func.func @_han_word_kernel(%arg0: memref<32x16xf32, #tpu.memory_space<vmem>>, %arg1: memref<2x2x16xf32, #tpu.memory_space<vmem>>, %arg2: memref<16x96xf32, #tpu.memory_space<vmem>>, %arg3: memref<1x96xf32, #tpu.memory_space<vmem>>, %arg4: memref<16x96xf32, #tpu.memory_space<vmem>>, %arg5: memref<1x96xf32, #tpu.memory_space<vmem>>, %arg6: memref<32x32xf32, #tpu.memory_space<vmem>>, %arg7: memref<1x32xf32, #tpu.memory_space<vmem>>, %arg8: memref<32x1xf32, #tpu.memory_space<vmem>>, %arg9: memref<2x32xf32, #tpu.memory_space<vmem>>, %arg10: memref<2x2x16xf32, #tpu.memory_space<vmem>>, %arg11: memref<2x8xf32, #tpu.memory_space<vmem>>, %arg12: memref<16x32xf32, #tpu.memory_space<vmem>>) attributes {dimension_semantics = [], scalar_prefetch = 0 : i64, scratch_operands = 1 : i64, tpu.core_type = #tpu.core_type<tc>} {
    %0 = tpu.iota {dimensions = array<i32: 0>} : vector<4x1xi32>
    %c2_i32 = arith.constant 2 : i32
    %1 = vector.broadcast %c2_i32 : i32 to vector<4x1xi32>
    %2 = arith.cmpi slt, %0, %1 : vector<4x1xi32>
    %c0 = arith.constant 0 : index
    %c0_0 = arith.constant 0 : index
    %3 = vector.load %arg0[%c0, %c0_0] : memref<32x16xf32, #tpu.memory_space<vmem>>, vector<32x16xf32>
    %c0_1 = arith.constant 0 : index
    %c0_2 = arith.constant 0 : index
    %4 = vector.load %arg2[%c0_1, %c0_2] : memref<16x96xf32, #tpu.memory_space<vmem>>, vector<16x96xf32>
    %cst = arith.constant dense<0.000000e+00> : vector<32x96xf32>
    %5 = tpu.matmul %3, %4, %cst {dimension_numbers = #tpu.dot_dimension_numbers<[1], [0], [0], [1], [0, 0, 1, 1], [], []>} : vector<32x16xf32>, vector<16x96xf32>, vector<32x96xf32> -> vector<32x96xf32>
    %c0_3 = arith.constant 0 : index
    %c0_4 = arith.constant 0 : index
    %6 = vector.load %arg3[%c0_3, %c0_4] : memref<1x96xf32, #tpu.memory_space<vmem>>, vector<1x96xf32>
    %7 = vector.broadcast %6 : vector<1x96xf32> to vector<32x96xf32>
    %8 = arith.addf %5, %7 : vector<32x96xf32>
    %9 = vector.extract_strided_slice %8 {offsets = [0, 0], sizes = [4, 96], strides = [1, 1]} : vector<32x96xf32> to vector<4x96xf32>
    %10 = vector.extract_strided_slice %9 {offsets = [0, 0], sizes = [4, 48], strides = [1, 1]} : vector<4x96xf32> to vector<4x48xf32>
    %11 = vector.extract_strided_slice %9 {offsets = [0, 48], sizes = [4, 48], strides = [1, 1]} : vector<4x96xf32> to vector<4x48xf32>
    %12 = vector.shape_cast %2 : vector<4x1xi1> to vector<4x1xi1>
    %13 = vector.broadcast %12 : vector<4x1xi1> to vector<4x48xi1>
    %14 = arith.select %13, %10, %11 : vector<4x48xi1>, vector<4x48xf32>
    %15 = vector.extract_strided_slice %14 {offsets = [0, 0], sizes = [4, 32], strides = [1, 1]} : vector<4x48xf32> to vector<4x32xf32>
    %16 = vector.extract_strided_slice %14 {offsets = [0, 32], sizes = [4, 16], strides = [1, 1]} : vector<4x48xf32> to vector<4x16xf32>
    %17 = vector.extract_strided_slice %8 {offsets = [4, 0], sizes = [4, 96], strides = [1, 1]} : vector<32x96xf32> to vector<4x96xf32>
    %18 = vector.extract_strided_slice %17 {offsets = [0, 0], sizes = [4, 48], strides = [1, 1]} : vector<4x96xf32> to vector<4x48xf32>
    %19 = vector.extract_strided_slice %17 {offsets = [0, 48], sizes = [4, 48], strides = [1, 1]} : vector<4x96xf32> to vector<4x48xf32>
    %20 = vector.shape_cast %2 : vector<4x1xi1> to vector<4x1xi1>
    %21 = vector.broadcast %20 : vector<4x1xi1> to vector<4x48xi1>
    %22 = arith.select %21, %18, %19 : vector<4x48xi1>, vector<4x48xf32>
    %23 = vector.extract_strided_slice %22 {offsets = [0, 0], sizes = [4, 32], strides = [1, 1]} : vector<4x48xf32> to vector<4x32xf32>
    %24 = vector.extract_strided_slice %22 {offsets = [0, 32], sizes = [4, 16], strides = [1, 1]} : vector<4x48xf32> to vector<4x16xf32>
    %25 = vector.extract_strided_slice %8 {offsets = [8, 0], sizes = [4, 96], strides = [1, 1]} : vector<32x96xf32> to vector<4x96xf32>
    %26 = vector.extract_strided_slice %25 {offsets = [0, 0], sizes = [4, 48], strides = [1, 1]} : vector<4x96xf32> to vector<4x48xf32>
    %27 = vector.extract_strided_slice %25 {offsets = [0, 48], sizes = [4, 48], strides = [1, 1]} : vector<4x96xf32> to vector<4x48xf32>
    %28 = vector.shape_cast %2 : vector<4x1xi1> to vector<4x1xi1>
    %29 = vector.broadcast %28 : vector<4x1xi1> to vector<4x48xi1>
    %30 = arith.select %29, %26, %27 : vector<4x48xi1>, vector<4x48xf32>
    %31 = vector.extract_strided_slice %30 {offsets = [0, 0], sizes = [4, 32], strides = [1, 1]} : vector<4x48xf32> to vector<4x32xf32>
    %32 = vector.extract_strided_slice %30 {offsets = [0, 32], sizes = [4, 16], strides = [1, 1]} : vector<4x48xf32> to vector<4x16xf32>
    %33 = vector.extract_strided_slice %8 {offsets = [12, 0], sizes = [4, 96], strides = [1, 1]} : vector<32x96xf32> to vector<4x96xf32>
    %34 = vector.extract_strided_slice %33 {offsets = [0, 0], sizes = [4, 48], strides = [1, 1]} : vector<4x96xf32> to vector<4x48xf32>
    %35 = vector.extract_strided_slice %33 {offsets = [0, 48], sizes = [4, 48], strides = [1, 1]} : vector<4x96xf32> to vector<4x48xf32>
    %36 = vector.shape_cast %2 : vector<4x1xi1> to vector<4x1xi1>
    %37 = vector.broadcast %36 : vector<4x1xi1> to vector<4x48xi1>
    %38 = arith.select %37, %34, %35 : vector<4x48xi1>, vector<4x48xf32>
    %39 = vector.extract_strided_slice %38 {offsets = [0, 0], sizes = [4, 32], strides = [1, 1]} : vector<4x48xf32> to vector<4x32xf32>
    %40 = vector.extract_strided_slice %38 {offsets = [0, 32], sizes = [4, 16], strides = [1, 1]} : vector<4x48xf32> to vector<4x16xf32>
    %41 = vector.extract_strided_slice %8 {offsets = [16, 0], sizes = [4, 96], strides = [1, 1]} : vector<32x96xf32> to vector<4x96xf32>
    %42 = vector.extract_strided_slice %41 {offsets = [0, 0], sizes = [4, 48], strides = [1, 1]} : vector<4x96xf32> to vector<4x48xf32>
    %43 = vector.extract_strided_slice %41 {offsets = [0, 48], sizes = [4, 48], strides = [1, 1]} : vector<4x96xf32> to vector<4x48xf32>
    %44 = vector.shape_cast %2 : vector<4x1xi1> to vector<4x1xi1>
    %45 = vector.broadcast %44 : vector<4x1xi1> to vector<4x48xi1>
    %46 = arith.select %45, %42, %43 : vector<4x48xi1>, vector<4x48xf32>
    %47 = vector.extract_strided_slice %46 {offsets = [0, 0], sizes = [4, 32], strides = [1, 1]} : vector<4x48xf32> to vector<4x32xf32>
    %48 = vector.extract_strided_slice %46 {offsets = [0, 32], sizes = [4, 16], strides = [1, 1]} : vector<4x48xf32> to vector<4x16xf32>
    %49 = vector.extract_strided_slice %8 {offsets = [20, 0], sizes = [4, 96], strides = [1, 1]} : vector<32x96xf32> to vector<4x96xf32>
    %50 = vector.extract_strided_slice %49 {offsets = [0, 0], sizes = [4, 48], strides = [1, 1]} : vector<4x96xf32> to vector<4x48xf32>
    %51 = vector.extract_strided_slice %49 {offsets = [0, 48], sizes = [4, 48], strides = [1, 1]} : vector<4x96xf32> to vector<4x48xf32>
    %52 = vector.shape_cast %2 : vector<4x1xi1> to vector<4x1xi1>
    %53 = vector.broadcast %52 : vector<4x1xi1> to vector<4x48xi1>
    %54 = arith.select %53, %50, %51 : vector<4x48xi1>, vector<4x48xf32>
    %55 = vector.extract_strided_slice %54 {offsets = [0, 0], sizes = [4, 32], strides = [1, 1]} : vector<4x48xf32> to vector<4x32xf32>
    %56 = vector.extract_strided_slice %54 {offsets = [0, 32], sizes = [4, 16], strides = [1, 1]} : vector<4x48xf32> to vector<4x16xf32>
    %57 = vector.extract_strided_slice %8 {offsets = [24, 0], sizes = [4, 96], strides = [1, 1]} : vector<32x96xf32> to vector<4x96xf32>
    %58 = vector.extract_strided_slice %57 {offsets = [0, 0], sizes = [4, 48], strides = [1, 1]} : vector<4x96xf32> to vector<4x48xf32>
    %59 = vector.extract_strided_slice %57 {offsets = [0, 48], sizes = [4, 48], strides = [1, 1]} : vector<4x96xf32> to vector<4x48xf32>
    %60 = vector.shape_cast %2 : vector<4x1xi1> to vector<4x1xi1>
    %61 = vector.broadcast %60 : vector<4x1xi1> to vector<4x48xi1>
    %62 = arith.select %61, %58, %59 : vector<4x48xi1>, vector<4x48xf32>
    %63 = vector.extract_strided_slice %62 {offsets = [0, 0], sizes = [4, 32], strides = [1, 1]} : vector<4x48xf32> to vector<4x32xf32>
    %64 = vector.extract_strided_slice %62 {offsets = [0, 32], sizes = [4, 16], strides = [1, 1]} : vector<4x48xf32> to vector<4x16xf32>
    %65 = vector.extract_strided_slice %8 {offsets = [28, 0], sizes = [4, 96], strides = [1, 1]} : vector<32x96xf32> to vector<4x96xf32>
    %66 = vector.extract_strided_slice %65 {offsets = [0, 0], sizes = [4, 48], strides = [1, 1]} : vector<4x96xf32> to vector<4x48xf32>
    %67 = vector.extract_strided_slice %65 {offsets = [0, 48], sizes = [4, 48], strides = [1, 1]} : vector<4x96xf32> to vector<4x48xf32>
    %68 = vector.shape_cast %2 : vector<4x1xi1> to vector<4x1xi1>
    %69 = vector.broadcast %68 : vector<4x1xi1> to vector<4x48xi1>
    %70 = arith.select %69, %66, %67 : vector<4x48xi1>, vector<4x48xf32>
    %71 = vector.extract_strided_slice %70 {offsets = [0, 0], sizes = [4, 32], strides = [1, 1]} : vector<4x48xf32> to vector<4x32xf32>
    %72 = vector.extract_strided_slice %70 {offsets = [0, 32], sizes = [4, 16], strides = [1, 1]} : vector<4x48xf32> to vector<4x16xf32>
    %c0_5 = arith.constant 0 : index
    %c0_6 = arith.constant 0 : index
    %c0_7 = arith.constant 0 : index
    %73 = vector.load %arg1[%c0_5, %c0_6, %c0_7] : memref<2x2x16xf32, #tpu.memory_space<vmem>>, vector<1x2x16xf32>
    %74 = vector.shape_cast %73 : vector<1x2x16xf32> to vector<2x16xf32>
    %c1 = arith.constant 1 : index
    %c0_8 = arith.constant 0 : index
    %c0_9 = arith.constant 0 : index
    %75 = vector.load %arg1[%c1, %c0_8, %c0_9] : memref<2x2x16xf32, #tpu.memory_space<vmem>>, vector<1x2x16xf32>
    %76 = vector.shape_cast %75 : vector<1x2x16xf32> to vector<2x16xf32>
    %77 = tpu.concatenate %74, %76 in 0 : vector<2x16xf32>, vector<2x16xf32> -> vector<4x16xf32>
    %c0_10 = arith.constant 0 : index
    %c0_11 = arith.constant 0 : index
    %78 = vector.load %arg4[%c0_10, %c0_11] : memref<16x96xf32, #tpu.memory_space<vmem>>, vector<16x96xf32>
    %c0_12 = arith.constant 0 : index
    %c0_13 = arith.constant 0 : index
    %79 = vector.load %arg5[%c0_12, %c0_13] : memref<1x96xf32, #tpu.memory_space<vmem>>, vector<1x96xf32>
    %cst_14 = arith.constant dense<0.000000e+00> : vector<4x96xf32>
    %80 = tpu.matmul %77, %78, %cst_14 {dimension_numbers = #tpu.dot_dimension_numbers<[1], [0], [0], [1], [0, 0, 1, 1], [], []>} : vector<4x16xf32>, vector<16x96xf32>, vector<4x96xf32> -> vector<4x96xf32>
    %81 = vector.broadcast %79 : vector<1x96xf32> to vector<4x96xf32>
    %82 = arith.addf %80, %81 : vector<4x96xf32>
    %83 = vector.extract_strided_slice %82 {offsets = [0, 0], sizes = [4, 48], strides = [1, 1]} : vector<4x96xf32> to vector<4x48xf32>
    %84 = vector.extract_strided_slice %82 {offsets = [0, 48], sizes = [4, 48], strides = [1, 1]} : vector<4x96xf32> to vector<4x48xf32>
    %85 = vector.shape_cast %2 : vector<4x1xi1> to vector<4x1xi1>
    %86 = vector.broadcast %85 : vector<4x1xi1> to vector<4x48xi1>
    %87 = arith.select %86, %83, %84 : vector<4x48xi1>, vector<4x48xf32>
    %88 = vector.extract_strided_slice %87 {offsets = [0, 0], sizes = [4, 32], strides = [1, 1]} : vector<4x48xf32> to vector<4x32xf32>
    %89 = arith.addf %15, %88 : vector<4x32xf32>
    %90 = arith.negf %89 : vector<4x32xf32>
    %91 = math.exp %90 : vector<4x32xf32>
    %cst_15 = arith.constant 1.000000e+00 : f32
    %92 = vector.broadcast %cst_15 : f32 to vector<4x32xf32>
    %93 = arith.addf %92, %91 : vector<4x32xf32>
    %94 = arith.divf %92, %93 : vector<4x32xf32>
    %95 = vector.extract_strided_slice %94 {offsets = [0, 0], sizes = [4, 16], strides = [1, 1]} : vector<4x32xf32> to vector<4x16xf32>
    %96 = vector.extract_strided_slice %94 {offsets = [0, 16], sizes = [4, 16], strides = [1, 1]} : vector<4x32xf32> to vector<4x16xf32>
    %97 = vector.extract_strided_slice %87 {offsets = [0, 32], sizes = [4, 16], strides = [1, 1]} : vector<4x48xf32> to vector<4x16xf32>
    %98 = arith.mulf %95, %97 : vector<4x16xf32>
    %99 = arith.addf %16, %98 : vector<4x16xf32>
    %100 = math.tanh %99 : vector<4x16xf32>
    %101 = arith.subf %77, %100 : vector<4x16xf32>
    %102 = arith.mulf %96, %101 : vector<4x16xf32>
    %103 = arith.addf %100, %102 : vector<4x16xf32>
    %104 = vector.extract_strided_slice %103 {offsets = [0, 0], sizes = [2, 16], strides = [1, 1]} : vector<4x16xf32> to vector<2x16xf32>
    %c0_16 = arith.constant 0 : index
    %c0_17 = arith.constant 0 : index
    %105 = vector.load %arg12[%c0_16, %c0_17] : memref<16x32xf32, #tpu.memory_space<vmem>>, vector<2x16xf32>
    tpu.vector_store %arg12[%c0_16, %c0_17], %104 {strides = array<i32>} : memref<16x32xf32, #tpu.memory_space<vmem>>, vector<2x16xf32>,
    %106 = vector.extract_strided_slice %103 {offsets = [2, 0], sizes = [2, 16], strides = [1, 1]} : vector<4x16xf32> to vector<2x16xf32>
    %c14 = arith.constant 14 : index
    %c16 = arith.constant 16 : index
    %107 = vector.load %arg12[%c14, %c16] : memref<16x32xf32, #tpu.memory_space<vmem>>, vector<2x16xf32>
    tpu.vector_store %arg12[%c14, %c16], %106 {strides = array<i32>} : memref<16x32xf32, #tpu.memory_space<vmem>>, vector<2x16xf32>,
    %cst_18 = arith.constant dense<0.000000e+00> : vector<4x96xf32>
    %108 = tpu.matmul %103, %78, %cst_18 {dimension_numbers = #tpu.dot_dimension_numbers<[1], [0], [0], [1], [0, 0, 1, 1], [], []>} : vector<4x16xf32>, vector<16x96xf32>, vector<4x96xf32> -> vector<4x96xf32>
    %109 = vector.broadcast %79 : vector<1x96xf32> to vector<4x96xf32>
    %110 = arith.addf %108, %109 : vector<4x96xf32>
    %111 = vector.extract_strided_slice %110 {offsets = [0, 0], sizes = [4, 48], strides = [1, 1]} : vector<4x96xf32> to vector<4x48xf32>
    %112 = vector.extract_strided_slice %110 {offsets = [0, 48], sizes = [4, 48], strides = [1, 1]} : vector<4x96xf32> to vector<4x48xf32>
    %113 = vector.shape_cast %2 : vector<4x1xi1> to vector<4x1xi1>
    %114 = vector.broadcast %113 : vector<4x1xi1> to vector<4x48xi1>
    %115 = arith.select %114, %111, %112 : vector<4x48xi1>, vector<4x48xf32>
    %116 = vector.extract_strided_slice %115 {offsets = [0, 0], sizes = [4, 32], strides = [1, 1]} : vector<4x48xf32> to vector<4x32xf32>
    %117 = arith.addf %23, %116 : vector<4x32xf32>
    %118 = arith.negf %117 : vector<4x32xf32>
    %119 = math.exp %118 : vector<4x32xf32>
    %cst_19 = arith.constant 1.000000e+00 : f32
    %120 = vector.broadcast %cst_19 : f32 to vector<4x32xf32>
    %121 = arith.addf %120, %119 : vector<4x32xf32>
    %122 = arith.divf %120, %121 : vector<4x32xf32>
    %123 = vector.extract_strided_slice %122 {offsets = [0, 0], sizes = [4, 16], strides = [1, 1]} : vector<4x32xf32> to vector<4x16xf32>
    %124 = vector.extract_strided_slice %122 {offsets = [0, 16], sizes = [4, 16], strides = [1, 1]} : vector<4x32xf32> to vector<4x16xf32>
    %125 = vector.extract_strided_slice %115 {offsets = [0, 32], sizes = [4, 16], strides = [1, 1]} : vector<4x48xf32> to vector<4x16xf32>
    %126 = arith.mulf %123, %125 : vector<4x16xf32>
    %127 = arith.addf %24, %126 : vector<4x16xf32>
    %128 = math.tanh %127 : vector<4x16xf32>
    %129 = arith.subf %103, %128 : vector<4x16xf32>
    %130 = arith.mulf %124, %129 : vector<4x16xf32>
    %131 = arith.addf %128, %130 : vector<4x16xf32>
    %132 = vector.extract_strided_slice %131 {offsets = [0, 0], sizes = [2, 16], strides = [1, 1]} : vector<4x16xf32> to vector<2x16xf32>
    %c2 = arith.constant 2 : index
    %c0_20 = arith.constant 0 : index
    %133 = vector.load %arg12[%c2, %c0_20] : memref<16x32xf32, #tpu.memory_space<vmem>>, vector<2x16xf32>
    tpu.vector_store %arg12[%c2, %c0_20], %132 {strides = array<i32>} : memref<16x32xf32, #tpu.memory_space<vmem>>, vector<2x16xf32>,
    %134 = vector.extract_strided_slice %131 {offsets = [2, 0], sizes = [2, 16], strides = [1, 1]} : vector<4x16xf32> to vector<2x16xf32>
    %c12 = arith.constant 12 : index
    %c16_21 = arith.constant 16 : index
    %135 = vector.load %arg12[%c12, %c16_21] : memref<16x32xf32, #tpu.memory_space<vmem>>, vector<2x16xf32>
    tpu.vector_store %arg12[%c12, %c16_21], %134 {strides = array<i32>} : memref<16x32xf32, #tpu.memory_space<vmem>>, vector<2x16xf32>,
    %cst_22 = arith.constant dense<0.000000e+00> : vector<4x96xf32>
    %136 = tpu.matmul %131, %78, %cst_22 {dimension_numbers = #tpu.dot_dimension_numbers<[1], [0], [0], [1], [0, 0, 1, 1], [], []>} : vector<4x16xf32>, vector<16x96xf32>, vector<4x96xf32> -> vector<4x96xf32>
    %137 = vector.broadcast %79 : vector<1x96xf32> to vector<4x96xf32>
    %138 = arith.addf %136, %137 : vector<4x96xf32>
    %139 = vector.extract_strided_slice %138 {offsets = [0, 0], sizes = [4, 48], strides = [1, 1]} : vector<4x96xf32> to vector<4x48xf32>
    %140 = vector.extract_strided_slice %138 {offsets = [0, 48], sizes = [4, 48], strides = [1, 1]} : vector<4x96xf32> to vector<4x48xf32>
    %141 = vector.shape_cast %2 : vector<4x1xi1> to vector<4x1xi1>
    %142 = vector.broadcast %141 : vector<4x1xi1> to vector<4x48xi1>
    %143 = arith.select %142, %139, %140 : vector<4x48xi1>, vector<4x48xf32>
    %144 = vector.extract_strided_slice %143 {offsets = [0, 0], sizes = [4, 32], strides = [1, 1]} : vector<4x48xf32> to vector<4x32xf32>
    %145 = arith.addf %31, %144 : vector<4x32xf32>
    %146 = arith.negf %145 : vector<4x32xf32>
    %147 = math.exp %146 : vector<4x32xf32>
    %cst_23 = arith.constant 1.000000e+00 : f32
    %148 = vector.broadcast %cst_23 : f32 to vector<4x32xf32>
    %149 = arith.addf %148, %147 : vector<4x32xf32>
    %150 = arith.divf %148, %149 : vector<4x32xf32>
    %151 = vector.extract_strided_slice %150 {offsets = [0, 0], sizes = [4, 16], strides = [1, 1]} : vector<4x32xf32> to vector<4x16xf32>
    %152 = vector.extract_strided_slice %150 {offsets = [0, 16], sizes = [4, 16], strides = [1, 1]} : vector<4x32xf32> to vector<4x16xf32>
    %153 = vector.extract_strided_slice %143 {offsets = [0, 32], sizes = [4, 16], strides = [1, 1]} : vector<4x48xf32> to vector<4x16xf32>
    %154 = arith.mulf %151, %153 : vector<4x16xf32>
    %155 = arith.addf %32, %154 : vector<4x16xf32>
    %156 = math.tanh %155 : vector<4x16xf32>
    %157 = arith.subf %131, %156 : vector<4x16xf32>
    %158 = arith.mulf %152, %157 : vector<4x16xf32>
    %159 = arith.addf %156, %158 : vector<4x16xf32>
    %160 = vector.extract_strided_slice %159 {offsets = [0, 0], sizes = [2, 16], strides = [1, 1]} : vector<4x16xf32> to vector<2x16xf32>
    %c4 = arith.constant 4 : index
    %c0_24 = arith.constant 0 : index
    %161 = vector.load %arg12[%c4, %c0_24] : memref<16x32xf32, #tpu.memory_space<vmem>>, vector<2x16xf32>
    tpu.vector_store %arg12[%c4, %c0_24], %160 {strides = array<i32>} : memref<16x32xf32, #tpu.memory_space<vmem>>, vector<2x16xf32>,
    %162 = vector.extract_strided_slice %159 {offsets = [2, 0], sizes = [2, 16], strides = [1, 1]} : vector<4x16xf32> to vector<2x16xf32>
    %c10 = arith.constant 10 : index
    %c16_25 = arith.constant 16 : index
    %163 = vector.load %arg12[%c10, %c16_25] : memref<16x32xf32, #tpu.memory_space<vmem>>, vector<2x16xf32>
    tpu.vector_store %arg12[%c10, %c16_25], %162 {strides = array<i32>} : memref<16x32xf32, #tpu.memory_space<vmem>>, vector<2x16xf32>,
    %cst_26 = arith.constant dense<0.000000e+00> : vector<4x96xf32>
    %164 = tpu.matmul %159, %78, %cst_26 {dimension_numbers = #tpu.dot_dimension_numbers<[1], [0], [0], [1], [0, 0, 1, 1], [], []>} : vector<4x16xf32>, vector<16x96xf32>, vector<4x96xf32> -> vector<4x96xf32>
    %165 = vector.broadcast %79 : vector<1x96xf32> to vector<4x96xf32>
    %166 = arith.addf %164, %165 : vector<4x96xf32>
    %167 = vector.extract_strided_slice %166 {offsets = [0, 0], sizes = [4, 48], strides = [1, 1]} : vector<4x96xf32> to vector<4x48xf32>
    %168 = vector.extract_strided_slice %166 {offsets = [0, 48], sizes = [4, 48], strides = [1, 1]} : vector<4x96xf32> to vector<4x48xf32>
    %169 = vector.shape_cast %2 : vector<4x1xi1> to vector<4x1xi1>
    %170 = vector.broadcast %169 : vector<4x1xi1> to vector<4x48xi1>
    %171 = arith.select %170, %167, %168 : vector<4x48xi1>, vector<4x48xf32>
    %172 = vector.extract_strided_slice %171 {offsets = [0, 0], sizes = [4, 32], strides = [1, 1]} : vector<4x48xf32> to vector<4x32xf32>
    %173 = arith.addf %39, %172 : vector<4x32xf32>
    %174 = arith.negf %173 : vector<4x32xf32>
    %175 = math.exp %174 : vector<4x32xf32>
    %cst_27 = arith.constant 1.000000e+00 : f32
    %176 = vector.broadcast %cst_27 : f32 to vector<4x32xf32>
    %177 = arith.addf %176, %175 : vector<4x32xf32>
    %178 = arith.divf %176, %177 : vector<4x32xf32>
    %179 = vector.extract_strided_slice %178 {offsets = [0, 0], sizes = [4, 16], strides = [1, 1]} : vector<4x32xf32> to vector<4x16xf32>
    %180 = vector.extract_strided_slice %178 {offsets = [0, 16], sizes = [4, 16], strides = [1, 1]} : vector<4x32xf32> to vector<4x16xf32>
    %181 = vector.extract_strided_slice %171 {offsets = [0, 32], sizes = [4, 16], strides = [1, 1]} : vector<4x48xf32> to vector<4x16xf32>
    %182 = arith.mulf %179, %181 : vector<4x16xf32>
    %183 = arith.addf %40, %182 : vector<4x16xf32>
    %184 = math.tanh %183 : vector<4x16xf32>
    %185 = arith.subf %159, %184 : vector<4x16xf32>
    %186 = arith.mulf %180, %185 : vector<4x16xf32>
    %187 = arith.addf %184, %186 : vector<4x16xf32>
    %188 = vector.extract_strided_slice %187 {offsets = [0, 0], sizes = [2, 16], strides = [1, 1]} : vector<4x16xf32> to vector<2x16xf32>
    %c6 = arith.constant 6 : index
    %c0_28 = arith.constant 0 : index
    %189 = vector.load %arg12[%c6, %c0_28] : memref<16x32xf32, #tpu.memory_space<vmem>>, vector<2x16xf32>
    tpu.vector_store %arg12[%c6, %c0_28], %188 {strides = array<i32>} : memref<16x32xf32, #tpu.memory_space<vmem>>, vector<2x16xf32>,
    %190 = vector.extract_strided_slice %187 {offsets = [2, 0], sizes = [2, 16], strides = [1, 1]} : vector<4x16xf32> to vector<2x16xf32>
    %c8 = arith.constant 8 : index
    %c16_29 = arith.constant 16 : index
    %191 = vector.load %arg12[%c8, %c16_29] : memref<16x32xf32, #tpu.memory_space<vmem>>, vector<2x16xf32>
    tpu.vector_store %arg12[%c8, %c16_29], %190 {strides = array<i32>} : memref<16x32xf32, #tpu.memory_space<vmem>>, vector<2x16xf32>,
    %cst_30 = arith.constant dense<0.000000e+00> : vector<4x96xf32>
    %192 = tpu.matmul %187, %78, %cst_30 {dimension_numbers = #tpu.dot_dimension_numbers<[1], [0], [0], [1], [0, 0, 1, 1], [], []>} : vector<4x16xf32>, vector<16x96xf32>, vector<4x96xf32> -> vector<4x96xf32>
    %193 = vector.broadcast %79 : vector<1x96xf32> to vector<4x96xf32>
    %194 = arith.addf %192, %193 : vector<4x96xf32>
    %195 = vector.extract_strided_slice %194 {offsets = [0, 0], sizes = [4, 48], strides = [1, 1]} : vector<4x96xf32> to vector<4x48xf32>
    %196 = vector.extract_strided_slice %194 {offsets = [0, 48], sizes = [4, 48], strides = [1, 1]} : vector<4x96xf32> to vector<4x48xf32>
    %197 = vector.shape_cast %2 : vector<4x1xi1> to vector<4x1xi1>
    %198 = vector.broadcast %197 : vector<4x1xi1> to vector<4x48xi1>
    %199 = arith.select %198, %195, %196 : vector<4x48xi1>, vector<4x48xf32>
    %200 = vector.extract_strided_slice %199 {offsets = [0, 0], sizes = [4, 32], strides = [1, 1]} : vector<4x48xf32> to vector<4x32xf32>
    %201 = arith.addf %47, %200 : vector<4x32xf32>
    %202 = arith.negf %201 : vector<4x32xf32>
    %203 = math.exp %202 : vector<4x32xf32>
    %cst_31 = arith.constant 1.000000e+00 : f32
    %204 = vector.broadcast %cst_31 : f32 to vector<4x32xf32>
    %205 = arith.addf %204, %203 : vector<4x32xf32>
    %206 = arith.divf %204, %205 : vector<4x32xf32>
    %207 = vector.extract_strided_slice %206 {offsets = [0, 0], sizes = [4, 16], strides = [1, 1]} : vector<4x32xf32> to vector<4x16xf32>
    %208 = vector.extract_strided_slice %206 {offsets = [0, 16], sizes = [4, 16], strides = [1, 1]} : vector<4x32xf32> to vector<4x16xf32>
    %209 = vector.extract_strided_slice %199 {offsets = [0, 32], sizes = [4, 16], strides = [1, 1]} : vector<4x48xf32> to vector<4x16xf32>
    %210 = arith.mulf %207, %209 : vector<4x16xf32>
    %211 = arith.addf %48, %210 : vector<4x16xf32>
    %212 = math.tanh %211 : vector<4x16xf32>
    %213 = arith.subf %187, %212 : vector<4x16xf32>
    %214 = arith.mulf %208, %213 : vector<4x16xf32>
    %215 = arith.addf %212, %214 : vector<4x16xf32>
    %216 = vector.extract_strided_slice %215 {offsets = [0, 0], sizes = [2, 16], strides = [1, 1]} : vector<4x16xf32> to vector<2x16xf32>
    %c8_32 = arith.constant 8 : index
    %c0_33 = arith.constant 0 : index
    %217 = vector.load %arg12[%c8_32, %c0_33] : memref<16x32xf32, #tpu.memory_space<vmem>>, vector<2x16xf32>
    tpu.vector_store %arg12[%c8_32, %c0_33], %216 {strides = array<i32>} : memref<16x32xf32, #tpu.memory_space<vmem>>, vector<2x16xf32>,
    %218 = vector.extract_strided_slice %215 {offsets = [2, 0], sizes = [2, 16], strides = [1, 1]} : vector<4x16xf32> to vector<2x16xf32>
    %c6_34 = arith.constant 6 : index
    %c16_35 = arith.constant 16 : index
    %219 = vector.load %arg12[%c6_34, %c16_35] : memref<16x32xf32, #tpu.memory_space<vmem>>, vector<2x16xf32>
    tpu.vector_store %arg12[%c6_34, %c16_35], %218 {strides = array<i32>} : memref<16x32xf32, #tpu.memory_space<vmem>>, vector<2x16xf32>,
    %cst_36 = arith.constant dense<0.000000e+00> : vector<4x96xf32>
    %220 = tpu.matmul %215, %78, %cst_36 {dimension_numbers = #tpu.dot_dimension_numbers<[1], [0], [0], [1], [0, 0, 1, 1], [], []>} : vector<4x16xf32>, vector<16x96xf32>, vector<4x96xf32> -> vector<4x96xf32>
    %221 = vector.broadcast %79 : vector<1x96xf32> to vector<4x96xf32>
    %222 = arith.addf %220, %221 : vector<4x96xf32>
    %223 = vector.extract_strided_slice %222 {offsets = [0, 0], sizes = [4, 48], strides = [1, 1]} : vector<4x96xf32> to vector<4x48xf32>
    %224 = vector.extract_strided_slice %222 {offsets = [0, 48], sizes = [4, 48], strides = [1, 1]} : vector<4x96xf32> to vector<4x48xf32>
    %225 = vector.shape_cast %2 : vector<4x1xi1> to vector<4x1xi1>
    %226 = vector.broadcast %225 : vector<4x1xi1> to vector<4x48xi1>
    %227 = arith.select %226, %223, %224 : vector<4x48xi1>, vector<4x48xf32>
    %228 = vector.extract_strided_slice %227 {offsets = [0, 0], sizes = [4, 32], strides = [1, 1]} : vector<4x48xf32> to vector<4x32xf32>
    %229 = arith.addf %55, %228 : vector<4x32xf32>
    %230 = arith.negf %229 : vector<4x32xf32>
    %231 = math.exp %230 : vector<4x32xf32>
    %cst_37 = arith.constant 1.000000e+00 : f32
    %232 = vector.broadcast %cst_37 : f32 to vector<4x32xf32>
    %233 = arith.addf %232, %231 : vector<4x32xf32>
    %234 = arith.divf %232, %233 : vector<4x32xf32>
    %235 = vector.extract_strided_slice %234 {offsets = [0, 0], sizes = [4, 16], strides = [1, 1]} : vector<4x32xf32> to vector<4x16xf32>
    %236 = vector.extract_strided_slice %234 {offsets = [0, 16], sizes = [4, 16], strides = [1, 1]} : vector<4x32xf32> to vector<4x16xf32>
    %237 = vector.extract_strided_slice %227 {offsets = [0, 32], sizes = [4, 16], strides = [1, 1]} : vector<4x48xf32> to vector<4x16xf32>
    %238 = arith.mulf %235, %237 : vector<4x16xf32>
    %239 = arith.addf %56, %238 : vector<4x16xf32>
    %240 = math.tanh %239 : vector<4x16xf32>
    %241 = arith.subf %215, %240 : vector<4x16xf32>
    %242 = arith.mulf %236, %241 : vector<4x16xf32>
    %243 = arith.addf %240, %242 : vector<4x16xf32>
    %244 = vector.extract_strided_slice %243 {offsets = [0, 0], sizes = [2, 16], strides = [1, 1]} : vector<4x16xf32> to vector<2x16xf32>
    %c10_38 = arith.constant 10 : index
    %c0_39 = arith.constant 0 : index
    %245 = vector.load %arg12[%c10_38, %c0_39] : memref<16x32xf32, #tpu.memory_space<vmem>>, vector<2x16xf32>
    tpu.vector_store %arg12[%c10_38, %c0_39], %244 {strides = array<i32>} : memref<16x32xf32, #tpu.memory_space<vmem>>, vector<2x16xf32>,
    %246 = vector.extract_strided_slice %243 {offsets = [2, 0], sizes = [2, 16], strides = [1, 1]} : vector<4x16xf32> to vector<2x16xf32>
    %c4_40 = arith.constant 4 : index
    %c16_41 = arith.constant 16 : index
    %247 = vector.load %arg12[%c4_40, %c16_41] : memref<16x32xf32, #tpu.memory_space<vmem>>, vector<2x16xf32>
    tpu.vector_store %arg12[%c4_40, %c16_41], %246 {strides = array<i32>} : memref<16x32xf32, #tpu.memory_space<vmem>>, vector<2x16xf32>,
    %cst_42 = arith.constant dense<0.000000e+00> : vector<4x96xf32>
    %248 = tpu.matmul %243, %78, %cst_42 {dimension_numbers = #tpu.dot_dimension_numbers<[1], [0], [0], [1], [0, 0, 1, 1], [], []>} : vector<4x16xf32>, vector<16x96xf32>, vector<4x96xf32> -> vector<4x96xf32>
    %249 = vector.broadcast %79 : vector<1x96xf32> to vector<4x96xf32>
    %250 = arith.addf %248, %249 : vector<4x96xf32>
    %251 = vector.extract_strided_slice %250 {offsets = [0, 0], sizes = [4, 48], strides = [1, 1]} : vector<4x96xf32> to vector<4x48xf32>
    %252 = vector.extract_strided_slice %250 {offsets = [0, 48], sizes = [4, 48], strides = [1, 1]} : vector<4x96xf32> to vector<4x48xf32>
    %253 = vector.shape_cast %2 : vector<4x1xi1> to vector<4x1xi1>
    %254 = vector.broadcast %253 : vector<4x1xi1> to vector<4x48xi1>
    %255 = arith.select %254, %251, %252 : vector<4x48xi1>, vector<4x48xf32>
    %256 = vector.extract_strided_slice %255 {offsets = [0, 0], sizes = [4, 32], strides = [1, 1]} : vector<4x48xf32> to vector<4x32xf32>
    %257 = arith.addf %63, %256 : vector<4x32xf32>
    %258 = arith.negf %257 : vector<4x32xf32>
    %259 = math.exp %258 : vector<4x32xf32>
    %cst_43 = arith.constant 1.000000e+00 : f32
    %260 = vector.broadcast %cst_43 : f32 to vector<4x32xf32>
    %261 = arith.addf %260, %259 : vector<4x32xf32>
    %262 = arith.divf %260, %261 : vector<4x32xf32>
    %263 = vector.extract_strided_slice %262 {offsets = [0, 0], sizes = [4, 16], strides = [1, 1]} : vector<4x32xf32> to vector<4x16xf32>
    %264 = vector.extract_strided_slice %262 {offsets = [0, 16], sizes = [4, 16], strides = [1, 1]} : vector<4x32xf32> to vector<4x16xf32>
    %265 = vector.extract_strided_slice %255 {offsets = [0, 32], sizes = [4, 16], strides = [1, 1]} : vector<4x48xf32> to vector<4x16xf32>
    %266 = arith.mulf %263, %265 : vector<4x16xf32>
    %267 = arith.addf %64, %266 : vector<4x16xf32>
    %268 = math.tanh %267 : vector<4x16xf32>
    %269 = arith.subf %243, %268 : vector<4x16xf32>
    %270 = arith.mulf %264, %269 : vector<4x16xf32>
    %271 = arith.addf %268, %270 : vector<4x16xf32>
    %272 = vector.extract_strided_slice %271 {offsets = [0, 0], sizes = [2, 16], strides = [1, 1]} : vector<4x16xf32> to vector<2x16xf32>
    %c12_44 = arith.constant 12 : index
    %c0_45 = arith.constant 0 : index
    %273 = vector.load %arg12[%c12_44, %c0_45] : memref<16x32xf32, #tpu.memory_space<vmem>>, vector<2x16xf32>
    tpu.vector_store %arg12[%c12_44, %c0_45], %272 {strides = array<i32>} : memref<16x32xf32, #tpu.memory_space<vmem>>, vector<2x16xf32>,
    %274 = vector.extract_strided_slice %271 {offsets = [2, 0], sizes = [2, 16], strides = [1, 1]} : vector<4x16xf32> to vector<2x16xf32>
    %c2_46 = arith.constant 2 : index
    %c16_47 = arith.constant 16 : index
    %275 = vector.load %arg12[%c2_46, %c16_47] : memref<16x32xf32, #tpu.memory_space<vmem>>, vector<2x16xf32>
    tpu.vector_store %arg12[%c2_46, %c16_47], %274 {strides = array<i32>} : memref<16x32xf32, #tpu.memory_space<vmem>>, vector<2x16xf32>,
    %cst_48 = arith.constant dense<0.000000e+00> : vector<4x96xf32>
    %276 = tpu.matmul %271, %78, %cst_48 {dimension_numbers = #tpu.dot_dimension_numbers<[1], [0], [0], [1], [0, 0, 1, 1], [], []>} : vector<4x16xf32>, vector<16x96xf32>, vector<4x96xf32> -> vector<4x96xf32>
    %277 = vector.broadcast %79 : vector<1x96xf32> to vector<4x96xf32>
    %278 = arith.addf %276, %277 : vector<4x96xf32>
    %279 = vector.extract_strided_slice %278 {offsets = [0, 0], sizes = [4, 48], strides = [1, 1]} : vector<4x96xf32> to vector<4x48xf32>
    %280 = vector.extract_strided_slice %278 {offsets = [0, 48], sizes = [4, 48], strides = [1, 1]} : vector<4x96xf32> to vector<4x48xf32>
    %281 = vector.shape_cast %2 : vector<4x1xi1> to vector<4x1xi1>
    %282 = vector.broadcast %281 : vector<4x1xi1> to vector<4x48xi1>
    %283 = arith.select %282, %279, %280 : vector<4x48xi1>, vector<4x48xf32>
    %284 = vector.extract_strided_slice %283 {offsets = [0, 0], sizes = [4, 32], strides = [1, 1]} : vector<4x48xf32> to vector<4x32xf32>
    %285 = arith.addf %71, %284 : vector<4x32xf32>
    %286 = arith.negf %285 : vector<4x32xf32>
    %287 = math.exp %286 : vector<4x32xf32>
    %cst_49 = arith.constant 1.000000e+00 : f32
    %288 = vector.broadcast %cst_49 : f32 to vector<4x32xf32>
    %289 = arith.addf %288, %287 : vector<4x32xf32>
    %290 = arith.divf %288, %289 : vector<4x32xf32>
    %291 = vector.extract_strided_slice %290 {offsets = [0, 0], sizes = [4, 16], strides = [1, 1]} : vector<4x32xf32> to vector<4x16xf32>
    %292 = vector.extract_strided_slice %290 {offsets = [0, 16], sizes = [4, 16], strides = [1, 1]} : vector<4x32xf32> to vector<4x16xf32>
    %293 = vector.extract_strided_slice %283 {offsets = [0, 32], sizes = [4, 16], strides = [1, 1]} : vector<4x48xf32> to vector<4x16xf32>
    %294 = arith.mulf %291, %293 : vector<4x16xf32>
    %295 = arith.addf %72, %294 : vector<4x16xf32>
    %296 = math.tanh %295 : vector<4x16xf32>
    %297 = arith.subf %271, %296 : vector<4x16xf32>
    %298 = arith.mulf %292, %297 : vector<4x16xf32>
    %299 = arith.addf %296, %298 : vector<4x16xf32>
    %300 = vector.extract_strided_slice %299 {offsets = [0, 0], sizes = [2, 16], strides = [1, 1]} : vector<4x16xf32> to vector<2x16xf32>
    %c14_50 = arith.constant 14 : index
    %c0_51 = arith.constant 0 : index
    %301 = vector.load %arg12[%c14_50, %c0_51] : memref<16x32xf32, #tpu.memory_space<vmem>>, vector<2x16xf32>
    tpu.vector_store %arg12[%c14_50, %c0_51], %300 {strides = array<i32>} : memref<16x32xf32, #tpu.memory_space<vmem>>, vector<2x16xf32>,
    %302 = vector.extract_strided_slice %299 {offsets = [2, 0], sizes = [2, 16], strides = [1, 1]} : vector<4x16xf32> to vector<2x16xf32>
    %c0_52 = arith.constant 0 : index
    %c16_53 = arith.constant 16 : index
    %303 = vector.load %arg12[%c0_52, %c16_53] : memref<16x32xf32, #tpu.memory_space<vmem>>, vector<2x16xf32>
    tpu.vector_store %arg12[%c0_52, %c16_53], %302 {strides = array<i32>} : memref<16x32xf32, #tpu.memory_space<vmem>>, vector<2x16xf32>,
    %304 = vector.extract_strided_slice %299 {offsets = [0, 0], sizes = [2, 16], strides = [1, 1]} : vector<4x16xf32> to vector<2x16xf32>
    %c0_54 = arith.constant 0 : index
    %c0_55 = arith.constant 0 : index
    %c0_56 = arith.constant 0 : index
    %305 = vector.load %arg10[%c0_54, %c0_55, %c0_56] : memref<2x2x16xf32, #tpu.memory_space<vmem>>, vector<1x2x16xf32>
    %306 = vector.shape_cast %305 : vector<1x2x16xf32> to vector<2x16xf32>
    %307 = vector.shape_cast %304 : vector<2x16xf32> to vector<1x2x16xf32>
    tpu.vector_store %arg10[%c0_54, %c0_55, %c0_56], %307 {strides = array<i32>} : memref<2x2x16xf32, #tpu.memory_space<vmem>>, vector<1x2x16xf32>,
    %308 = vector.extract_strided_slice %299 {offsets = [2, 0], sizes = [2, 16], strides = [1, 1]} : vector<4x16xf32> to vector<2x16xf32>
    %c1_57 = arith.constant 1 : index
    %c0_58 = arith.constant 0 : index
    %c0_59 = arith.constant 0 : index
    %309 = vector.load %arg10[%c1_57, %c0_58, %c0_59] : memref<2x2x16xf32, #tpu.memory_space<vmem>>, vector<1x2x16xf32>
    %310 = vector.shape_cast %309 : vector<1x2x16xf32> to vector<2x16xf32>
    %311 = vector.shape_cast %308 : vector<2x16xf32> to vector<1x2x16xf32>
    tpu.vector_store %arg10[%c1_57, %c0_58, %c0_59], %311 {strides = array<i32>} : memref<2x2x16xf32, #tpu.memory_space<vmem>>, vector<1x2x16xf32>,
    %c0_60 = arith.constant 0 : index
    %c0_61 = arith.constant 0 : index
    %312 = vector.load %arg12[%c0_60, %c0_61] : memref<16x32xf32, #tpu.memory_space<vmem>>, vector<16x32xf32>
    %c0_62 = arith.constant 0 : index
    %c0_63 = arith.constant 0 : index
    %313 = vector.load %arg6[%c0_62, %c0_63] : memref<32x32xf32, #tpu.memory_space<vmem>>, vector<32x32xf32>
    %cst_64 = arith.constant dense<0.000000e+00> : vector<16x32xf32>
    %314 = tpu.matmul %312, %313, %cst_64 {dimension_numbers = #tpu.dot_dimension_numbers<[1], [0], [0], [1], [0, 0, 1, 1], [], []>} : vector<16x32xf32>, vector<32x32xf32>, vector<16x32xf32> -> vector<16x32xf32>
    %c0_65 = arith.constant 0 : index
    %c0_66 = arith.constant 0 : index
    %315 = vector.load %arg7[%c0_65, %c0_66] : memref<1x32xf32, #tpu.memory_space<vmem>>, vector<1x32xf32>
    %316 = vector.broadcast %315 : vector<1x32xf32> to vector<16x32xf32>
    %317 = arith.addf %314, %316 : vector<16x32xf32>
    %318 = math.tanh %317 : vector<16x32xf32>
    %c0_67 = arith.constant 0 : index
    %c0_68 = arith.constant 0 : index
    %319 = vector.load %arg8[%c0_67, %c0_68] : memref<32x1xf32, #tpu.memory_space<vmem>>, vector<32x1xf32>
    %cst_69 = arith.constant dense<0.000000e+00> : vector<16x1xf32>
    %320 = tpu.matmul %318, %319, %cst_69 {dimension_numbers = #tpu.dot_dimension_numbers<[1], [0], [0], [1], [0, 0, 1, 1], [], []>} : vector<16x32xf32>, vector<32x1xf32>, vector<16x1xf32> -> vector<16x1xf32>
    %cst_70 = arith.constant dense<0xFF800000> : vector<1xf32>
    %321 = vector.multi_reduction <maximumf>, %320, %cst_70 [0] : vector<16x1xf32> to vector<1xf32>
    %322 = vector.shape_cast %321 : vector<1xf32> to vector<1x1xf32>
    %323 = vector.broadcast %322 : vector<1x1xf32> to vector<16x1xf32>
    %324 = arith.subf %320, %323 : vector<16x1xf32>
    %325 = math.exp %324 : vector<16x1xf32>
    %326 = tpu.iota {dimensions = array<i32: 0>} : vector<2x2xi32>
    %327 = tpu.iota {dimensions = array<i32: 1>} : vector<2x2xi32>
    %328 = arith.cmpi eq, %326, %327 : vector<2x2xi32>
    %329 = arith.extui %328 : vector<2x2xi1> to vector<2x2xi32>
    %330 = arith.sitofp %329 : vector<2x2xi32> to vector<2x2xf32>
    %331 = tpu.concatenate %330, %330, %330, %330, %330, %330, %330, %330 in 1 : vector<2x2xf32>, vector<2x2xf32>, vector<2x2xf32>, vector<2x2xf32>, vector<2x2xf32>, vector<2x2xf32>, vector<2x2xf32>, vector<2x2xf32> -> vector<2x16xf32>
    %332 = tpu.iota {dimensions = array<i32: 0>} : vector<16x8xi32>
    %333 = tpu.iota {dimensions = array<i32: 1>} : vector<16x8xi32>
    %c2_i32_71 = arith.constant 2 : i32
    %334 = vector.broadcast %c2_i32_71 : i32 to vector<16x8xi32>
    %335 = arith.muli %333, %334 : vector<16x8xi32>
    %336 = arith.cmpi sge, %332, %335 : vector<16x8xi32>
    %c1_i32 = arith.constant 1 : i32
    %337 = vector.broadcast %c1_i32 : i32 to vector<16x8xi32>
    %338 = arith.addi %333, %337 : vector<16x8xi32>
    %c2_i32_72 = arith.constant 2 : i32
    %339 = vector.broadcast %c2_i32_72 : i32 to vector<16x8xi32>
    %340 = arith.muli %338, %339 : vector<16x8xi32>
    %341 = arith.cmpi slt, %332, %340 : vector<16x8xi32>
    %342 = arith.andi %336, %341 : vector<16x8xi1>
    %343 = arith.extui %342 : vector<16x8xi1> to vector<16x8xi32>
    %344 = arith.sitofp %343 : vector<16x8xi32> to vector<16x8xf32>
    %345 = vector.broadcast %325 : vector<16x1xf32> to vector<16x8xf32>
    %346 = arith.mulf %345, %344 : vector<16x8xf32>
    %cst_73 = arith.constant dense<0.000000e+00> : vector<2x8xf32>
    %347 = tpu.matmul %331, %346, %cst_73 {dimension_numbers = #tpu.dot_dimension_numbers<[1], [0], [0], [1], [0, 0, 1, 1], [], []>} : vector<2x16xf32>, vector<16x8xf32>, vector<2x8xf32> -> vector<2x8xf32>
    %348 = vector.broadcast %325 : vector<16x1xf32> to vector<16x32xf32>
    %349 = arith.mulf %348, %312 : vector<16x32xf32>
    %cst_74 = arith.constant dense<0.000000e+00> : vector<2x32xf32>
    %350 = tpu.matmul %331, %349, %cst_74 {dimension_numbers = #tpu.dot_dimension_numbers<[1], [0], [0], [1], [0, 0, 1, 1], [], []>} : vector<2x16xf32>, vector<16x32xf32>, vector<2x32xf32> -> vector<2x32xf32>
    %cst_75 = arith.constant dense<0.000000e+00> : vector<2xf32>
    %351 = vector.multi_reduction <add>, %347, %cst_75 [1] : vector<2x8xf32> to vector<2xf32>
    %352 = vector.shape_cast %351 : vector<2xf32> to vector<2x1xf32>
    %353 = tpu.reciprocal %352 {approx = true} : vector<2x1xf32> -> vector<2x1xf32>
    %354 = vector.broadcast %353 : vector<2x1xf32> to vector<2x8xf32>
    %355 = arith.mulf %347, %354 : vector<2x8xf32>
    %c0_76 = arith.constant 0 : index
    %c0_77 = arith.constant 0 : index
    %356 = vector.load %arg11[%c0_76, %c0_77] : memref<2x8xf32, #tpu.memory_space<vmem>>, vector<2x8xf32>
    tpu.vector_store %arg11[%c0_76, %c0_77], %355 {strides = array<i32>} : memref<2x8xf32, #tpu.memory_space<vmem>>, vector<2x8xf32>,
    %357 = vector.broadcast %353 : vector<2x1xf32> to vector<2x32xf32>
    %358 = arith.mulf %350, %357 : vector<2x32xf32>
    %c0_78 = arith.constant 0 : index
    %c0_79 = arith.constant 0 : index
    %359 = vector.load %arg9[%c0_78, %c0_79] : memref<2x32xf32, #tpu.memory_space<vmem>>, vector<2x32xf32>
    tpu.vector_store %arg9[%c0_78, %c0_79], %358 {strides = array<i32>} : memref<2x32xf32, #tpu.memory_space<vmem>>, vector<2x32xf32>,
    return
  }
}

</mosaic_0001>

<llo_original>
// kernel: attention_word_rnn_forward.1
$region0: #{attention_word_rnn_forward.1}
  #allocation0 [shape = 'u32[]', space=smem, size = 0x4, offset = 0x4, fixed_abs, tag = 'smem constant byte address 0x4 - core index']
  #allocation1 [shape = 'u32[72,128]{1,0:T(1,128)}', space=vmem, size = 0x9000, scoped, tag = 'internal scratch']
  #allocation2 [shape = 'f32[16,32]{1,0:T(8,128)}', space=vmem, size = 0x2000, scoped, tag = 'scratch operand']
  %s0 = inlined_call_operand.vmem [shape: f32[32,16], index: 0, kind: input, shape index: {}]
  %s1 = inlined_call_operand.vmem [shape: f32[2,2,16], index: 1, kind: input, shape index: {}]
  %s2 = inlined_call_operand.vmem [shape: f32[16,96], index: 2, kind: input, shape index: {}]
  %s3 = inlined_call_operand.vmem [shape: f32[1,96], index: 3, kind: input, shape index: {}]
  %s4 = inlined_call_operand.vmem [shape: f32[16,96], index: 4, kind: input, shape index: {}]
  %s5 = inlined_call_operand.vmem [shape: f32[1,96], index: 5, kind: input, shape index: {}]
  %s6 = inlined_call_operand.vmem [shape: f32[32,32], index: 6, kind: input, shape index: {}]
  %s7 = inlined_call_operand.vmem [shape: f32[1,32], index: 7, kind: input, shape index: {}]
  %s8 = inlined_call_operand.vmem [shape: f32[32,1], index: 8, kind: input, shape index: {}]
  %s9 = inlined_call_operand.hbm [shape: f32[2,32], index: 9, kind: output, shape index: {0}]
  %s10 = inlined_call_operand.hbm [shape: f32[2,2,16], index: 10, kind: output, shape index: {1}]
  %s11 = inlined_call_operand.hbm [shape: f32[2,8], index: 11, kind: output, shape index: {2}]
  %12 = xla_tuple %s9, %s10, %s11
  %s13 = sld [smem:[#allocation0]]
  $region62: #{attention_word_rnn_forward.1} parent=0
    _
  %s15 = ssub.s32 1, %s13
  %s16 = scalar_select 0, %s15, %s13
  $region1: #{attention_word_rnn_forward.1} parent=0
    #allocation3 [shape = 'u8[1024]{0}', space=vmem, size = 0x400, scoped, tag = 'output window, operand 0, single buffered']
    #allocation4 [shape = 's32[1]{0}', space=sflag, size = 0x4, scoped, tag = 'scoped memory for attention_word_rnn_forward.1']
    #allocation5 [shape = 'u8[2048]{0}', space=vmem, size = 0x800, scoped, tag = 'output window, operand 1, single buffered']
    #allocation6 [shape = 's32[1]{0}', space=sflag, size = 0x4, scoped, tag = 'scoped memory for attention_word_rnn_forward.1']
    #allocation7 [shape = 'u8[1024]{0}', space=vmem, size = 0x400, scoped, tag = 'output window, operand 2, single buffered']
    %17 = vsyncpa [#allocation4], 0
    %18 = vsyncpa [#allocation6], 0
    // Predicated region
    $region2: #{attention_word_rnn_forward.1} parent=1 // pred_check
      _
    $region3: #{attention_word_rnn_forward.1} parent=1 // pred_check_branch
      %20 = sbr.rel (0) target = $region5
    $region4: #{attention_word_rnn_forward.1} parent=1 // pred_region
      _
    $region5: #{attention_word_rnn_forward.1} parent=1 // pred_fallthru
      _
    // Predicated region
    $region6: #{attention_word_rnn_forward.1} parent=1 // pred_check
      _
    $region7: #{attention_word_rnn_forward.1} parent=1 // pred_check_branch
      %22 = sbr.rel (0) target = $region9
    $region8: #{attention_word_rnn_forward.1} parent=1 // pred_region
      _
    $region9: #{attention_word_rnn_forward.1} parent=1 // pred_fallthru
      _
    // Predicated region
    $region10: #{attention_word_rnn_forward.1} parent=1 // pred_check
      _
    $region11: #{attention_word_rnn_forward.1} parent=1 // pred_check_branch
      %24 = sbr.rel (0) target = $region13
    $region12: #{attention_word_rnn_forward.1} parent=1 // pred_region
      _
    $region13: #{attention_word_rnn_forward.1} parent=1 // pred_fallthru
      _
    // Predicated region
    $region14: #{attention_word_rnn_forward.1} parent=1 // pred_check
      _
    $region15: #{attention_word_rnn_forward.1} parent=1 // pred_check_branch
      %26 = sbr.rel (0) target = $region17
    $region16: #{attention_word_rnn_forward.1} parent=1 // pred_region
      _
    $region17: #{attention_word_rnn_forward.1} parent=1 // pred_fallthru
      _
    // Predicated region
    $region18: #{attention_word_rnn_forward.1} parent=1 // pred_check
      _
    $region19: #{attention_word_rnn_forward.1} parent=1 // pred_check_branch
      %28 = sbr.rel (0) target = $region21
    $region20: #{attention_word_rnn_forward.1} parent=1 // pred_region
      _
    $region21: #{attention_word_rnn_forward.1} parent=1 // pred_fallthru
      _
    // Predicated region
    $region22: #{attention_word_rnn_forward.1} parent=1 // pred_check
      _
    $region23: #{attention_word_rnn_forward.1} parent=1 // pred_check_branch
      %30 = sbr.rel (0) target = $region25
    $region24: #{attention_word_rnn_forward.1} parent=1 // pred_region
      _
    $region25: #{attention_word_rnn_forward.1} parent=1 // pred_fallthru
      _
    // Predicated region
    $region26: #{attention_word_rnn_forward.1} parent=1 // pred_check
      _
    $region27: #{attention_word_rnn_forward.1} parent=1 // pred_check_branch
      %32 = sbr.rel (0) target = $region29
    $region28: #{attention_word_rnn_forward.1} parent=1 // pred_region
      _
    $region29: #{attention_word_rnn_forward.1} parent=1 // pred_fallthru
      _
    // Predicated region
    $region30: #{attention_word_rnn_forward.1} parent=1 // pred_check
      _
    $region31: #{attention_word_rnn_forward.1} parent=1 // pred_check_branch
      %34 = sbr.rel (0) target = $region33
    $region32: #{attention_word_rnn_forward.1} parent=1 // pred_region
      _
    $region33: #{attention_word_rnn_forward.1} parent=1 // pred_fallthru
      _
    // Predicated region
    $region34: #{attention_word_rnn_forward.1} parent=1 // pred_check
      _
    $region35: #{attention_word_rnn_forward.1} parent=1 // pred_check_branch
      %36 = sbr.rel (0) target = $region37
    $region36: #{attention_word_rnn_forward.1} parent=1 // pred_region
      _
    $region37: #{attention_word_rnn_forward.1} parent=1 // pred_fallthru
      _
    %v37 = vlaneseq
    %v38 = vshrl.u32 %v37, 7
    %vm39 = vcmp.lt.s32.totalorder %v38, 2
    %v40 = vld [vmem:[%s0] sm:$0xff]
    %v41 = vld [vmem:[%s0 + $0x8] sm:$0xff]
    %v42 = vld [vmem:[%s0 + $0x10] sm:$0xff]
    %v43 = vld [vmem:[%s0 + $0x18] sm:$0xff]
    %v44 = vld [vmem:[%s2] sm:$0xff]
    %v45 = vld [vmem:[%s2 + $0x8] sm:$0xff]
    %v46 = vld [vmem:[%s3] sm:$0x1]
    %v48 = vperm.slane %v46, 0
    %vm50 = vcmask 130048
    %v52 = vsel %vm50, %v40, 0
    %v55 = vsel %vm50, %v41, 0
    %v58 = vsel %vm50, %v42, 0
    %v61 = vsel %vm50, %v43, 0
    %63 = vmatpush.msra.mxu0 0.0
    %64 = vmatpush.msra.mxu0 0.0
    %65 = vmatpush.msra.mxu0 0.0
    %66 = vmatpush.msra.mxu0 0.0
    %67 = vmatpush.msra.mxu0 0.0
    %68 = vmatpush.msra.mxu0 0.0
    %69 = vmatpush.msra.mxu0 0.0
    %70 = vmatpush.msra.mxu0 0.0
    %71 = vmatpush.msra.mxu0 0.0
    %72 = vmatpush.msra.mxu0 0.0
    %73 = vmatpush.msra.mxu0 0.0
    %74 = vmatpush.msra.mxu0 0.0
    %75 = vmatpush.msra.mxu0 0.0
    %76 = vmatpush.msra.mxu0 0.0
    %77 = vmatpush.msra.mxu0 %v45
    %78 = vmatpush.msra.mxu0 %v44
    %79 = vmatmul.f32.gmra.mxu0 %v52
    %v80 = vpop.f32.mrf.mxu0
    %v81 = vadd.f32 %v48, %v80
    %82 = vmatmul.f32.gmra.mxu0 %v55
    %v83 = vpop.f32.mrf.mxu0
    %v84 = vadd.f32 %v48, %v83
    %85 = vmatmul.f32.gmra.mxu0 %v58
    %v86 = vpop.f32.mrf.mxu0
    %v87 = vadd.f32 %v48, %v86
    %88 = vmatmul.f32.gmra.mxu0 %v61
    %v89 = vpop.f32.mrf.mxu0
    %v90 = vadd.f32 %v48, %v89
    %91 = vdwg.mxu0
    %v92 = vsel %vm39, 1, 0
    %vm93 = vcmp.eq.s32.totalorder %v92, 1
    %95 = vrot.lane.b32.xlu0 %v81, 80
    %v96 = vpop.permute.xlu0 %95
    %v98 = vsel %vm93, %v81, %v96
    %v99 = vrot.slane %v81, 4
    %101 = vrot.lane.b32.xlu0 %v99, 80
    %v102 = vpop.permute.xlu0 %101
    %v104 = vsel %vm93, %v99, %v102
    %106 = vrot.lane.b32.xlu0 %v84, 80
    %v107 = vpop.permute.xlu0 %106
    %v109 = vsel %vm93, %v84, %v107
    %v110 = vrot.slane %v84, 4
    %112 = vrot.lane.b32.xlu0 %v110, 80
    %v113 = vpop.permute.xlu0 %112
    %v115 = vsel %vm93, %v110, %v113
    %117 = vrot.lane.b32.xlu0 %v87, 80
    %v118 = vpop.permute.xlu0 %117
    %v120 = vsel %vm93, %v87, %v118
    %v121 = vrot.slane %v87, 4
    %123 = vrot.lane.b32.xlu0 %v121, 80
    %v124 = vpop.permute.xlu0 %123
    %v126 = vsel %vm93, %v121, %v124
    %128 = vrot.lane.b32.xlu0 %v90, 80
    %v129 = vpop.permute.xlu0 %128
    %v131 = vsel %vm93, %v90, %v129
    %v132 = vrot.slane %v90, 4
    %134 = vrot.lane.b32.xlu0 %v132, 80
    %v135 = vpop.permute.xlu0 %134
    %v137 = vsel %vm93, %v132, %v135
    %v138 = vld [vmem:[%s1] sm:$0x3]
    %s139 = scalar_lea.vmem %s1, 2
    %v140 = vld [vmem:[%s139] sm:$0x3]
    %v142 = vrot.slane %v140, 6
    %vm144 = vcmask 1041408
    %v145 = vsel %vm144, %v138, %v142
    %v146 = vld [vmem:[%s4] sm:$0xff]
    %v147 = vld [vmem:[%s4 + $0x8] sm:$0xff]
    %v148 = vld [vmem:[%s5] sm:$0x1]
    %v150 = vperm.slane %v148, 0
    %v153 = vsel %vm50, %v145, 0
    %155 = vmatpush.msra.mxu0 0.0
    %156 = vmatpush.msra.mxu0 0.0
    %157 = vmatpush.msra.mxu0 0.0
    %158 = vmatpush.msra.mxu0 0.0
    %159 = vmatpush.msra.mxu0 0.0
    %160 = vmatpush.msra.mxu0 0.0
    %161 = vmatpush.msra.mxu0 0.0
    %162 = vmatpush.msra.mxu0 0.0
    %163 = vmatpush.msra.mxu0 0.0
    %164 = vmatpush.msra.mxu0 0.0
    %165 = vmatpush.msra.mxu0 0.0
    %166 = vmatpush.msra.mxu0 0.0
    %167 = vmatpush.msra.mxu0 0.0
    %168 = vmatpush.msra.mxu0 0.0
    %169 = vmatpush.msra.mxu0 %v147
    %170 = vmatpush.msra.mxu0 %v146
    %171 = vmatmul.f32.gmra.mxu0 %v153
    %v172 = vpop.f32.mrf.mxu0
    %v173 = vadd.f32 %v150, %v172
    %174 = vdwg.mxu0
    %176 = vrot.lane.b32.xlu0 %v173, 80
    %v177 = vpop.permute.xlu0 %176
    %v179 = vsel %vm93, %v173, %v177
    %v180 = vadd.f32 %v98, %v179
    %v181 = vxor.u32 %v180, 2147483648
    %v182 = vmul.f32 %v181, 1.442695
    %v183 = vpow.pop %v182
    %v184 = vadd.f32 %v183, 1.0
    %v185 = vrcp.pop %v184
    %v186 = vmul.f32 %v184, %v185
    %v187 = vsub.f32 1.0, %v186
    %v188 = vmul.f32 %v185, %v187
    %v189 = vadd.f32 %v185, %v188
    %vm190 = vweird.f32 %v184
    %vm191 = vweird.f32 %v185
    %vm192 = vmor %vm190, %vm191
    %v193 = vsel %vm192, %v185, %v189
    %v194 = vand.u32 2147483647, %v184
    %vm195 = vcmp.eq.f32.partialorder %v194, 8.507059e+37
    %v196 = vand.u32 %v184, 2147483648
    %v197 = vor.u32 1.1754944e-38, %v196
    %v198 = vsel %vm195, %v197, %v193
    %v199 = vmul.f32 1.0, %v198
    %201 = vrot.lane.b32.xlu0 %v179, 96
    %v202 = vpop.permute.xlu0 %201
    %v204 = vmul.f32 %v199, %v202
    %206 = vrot.lane.b32.xlu0 %v204, 32
    %v207 = vpop.permute.xlu0 %206
    %v209 = vadd.f32 %v98, %v207
    %v210 = vtanh.pop %v209
    %212 = vrot.lane.b32.xlu0 %v210, 96
    %v213 = vpop.permute.xlu0 %212
    %v215 = vsub.f32 %v145, %v213
    %217 = vrot.lane.b32.xlu0 %v215, 16
    %v218 = vpop.permute.xlu0 %217
    %v220 = vmul.f32 %v199, %v218
    %222 = vrot.lane.b32.xlu0 %v220, 16
    %v223 = vpop.permute.xlu0 %222
    %v225 = vadd.f32 %v210, %v223
    %227 = vrot.lane.b32.xlu0 %v225, 96
    %v228 = vpop.permute.xlu0 %227
    %vm230 = vcmask 123904
    %231 = vst.msk [vmem:[#allocation2] sm:$0x3] %vm230, %v228
    %232 = vrot.lane.b32.xlu0 %v225, 112
    %v233 = vpop.permute.xlu0 %232
    %vm235 = vcmask 257154
    %236 = vst.msk [vmem:[#allocation2 + $0xc] sm:$0xc] %vm235, %v233
    %v237 = vsel %vm50, %v228, 0
    %239 = vmatpush.msra.mxu0 0.0
    %240 = vmatpush.msra.mxu0 0.0
    %241 = vmatpush.msra.mxu0 0.0
    %242 = vmatpush.msra.mxu0 0.0
    %243 = vmatpush.msra.mxu0 0.0
    %244 = vmatpush.msra.mxu0 0.0
    %245 = vmatpush.msra.mxu0 0.0
    %246 = vmatpush.msra.mxu0 0.0
    %247 = vmatpush.msra.mxu0 0.0
    %248 = vmatpush.msra.mxu0 0.0
    %249 = vmatpush.msra.mxu0 0.0
    %250 = vmatpush.msra.mxu0 0.0
    %251 = vmatpush.msra.mxu0 0.0
    %252 = vmatpush.msra.mxu0 0.0
    %253 = vmatpush.msra.mxu0 %v147
    %254 = vmatpush.msra.mxu0 %v146
    %255 = vmatmul.f32.gmra.mxu0 %v237
    %v256 = vpop.f32.mrf.mxu0
    %v257 = vadd.f32 %v150, %v256
    %258 = vdwg.mxu0
    %260 = vrot.lane.b32.xlu0 %v257, 80
    %v261 = vpop.permute.xlu0 %260
    %v263 = vsel %vm93, %v257, %v261
    %v264 = vadd.f32 %v104, %v263
    %v265 = vxor.u32 %v264, 2147483648
    %v266 = vmul.f32 %v265, 1.442695
    %v267 = vpow.pop %v266
    %v268 = vadd.f32 %v267, 1.0
    %v269 = vrcp.pop %v268
    %v270 = vmul.f32 %v268, %v269
    %v271 = vsub.f32 1.0, %v270
    %v272 = vmul.f32 %v269, %v271
    %v273 = vadd.f32 %v269, %v272
    %vm274 = vweird.f32 %v268
    %vm275 = vweird.f32 %v269
    %vm276 = vmor %vm274, %vm275
    %v277 = vsel %vm276, %v269, %v273
    %v278 = vand.u32 2147483647, %v268
    %vm279 = vcmp.eq.f32.partialorder %v278, 8.507059e+37
    %v280 = vand.u32 %v268, 2147483648
    %v281 = vor.u32 1.1754944e-38, %v280
    %v282 = vsel %vm279, %v281, %v277
    %v283 = vmul.f32 1.0, %v282
    %285 = vrot.lane.b32.xlu0 %v263, 96
    %v286 = vpop.permute.xlu0 %285
    %v288 = vmul.f32 %v283, %v286
    %290 = vrot.lane.b32.xlu0 %v288, 32
    %v291 = vpop.permute.xlu0 %290
    %v293 = vadd.f32 %v104, %v291
    %v294 = vtanh.pop %v293
    %v295 = vsub.f32 %v225, %v294
    %297 = vrot.lane.b32.xlu0 %v295, 112
    %v298 = vpop.permute.xlu0 %297
    %v300 = vmul.f32 %v283, %v298
    %302 = vrot.lane.b32.xlu0 %v300, 16
    %v303 = vpop.permute.xlu0 %302
    %v305 = vadd.f32 %v294, %v303
    %307 = vrot.lane.b32.xlu0 %v305, 96
    %v308 = vpop.permute.xlu0 %307
    %310 = vst.msk [vmem:[#allocation2 + $0x2] sm:$0x3] %vm230, %v308
    %311 = vrot.lane.b32.xlu0 %v305, 112
    %v312 = vpop.permute.xlu0 %311
    %314 = vst.msk [vmem:[#allocation2 + $0xa] sm:$0xc] %vm235, %v312
    %v315 = vsel %vm50, %v308, 0
    %317 = vmatpush.msra.mxu0 0.0
    %318 = vmatpush.msra.mxu0 0.0
    %319 = vmatpush.msra.mxu0 0.0
    %320 = vmatpush.msra.mxu0 0.0
    %321 = vmatpush.msra.mxu0 0.0
    %322 = vmatpush.msra.mxu0 0.0
    %323 = vmatpush.msra.mxu0 0.0
    %324 = vmatpush.msra.mxu0 0.0
    %325 = vmatpush.msra.mxu0 0.0
    %326 = vmatpush.msra.mxu0 0.0
    %327 = vmatpush.msra.mxu0 0.0
    %328 = vmatpush.msra.mxu0 0.0
    %329 = vmatpush.msra.mxu0 0.0
    %330 = vmatpush.msra.mxu0 0.0
    %331 = vmatpush.msra.mxu0 %v147
    %332 = vmatpush.msra.mxu0 %v146
    %333 = vmatmul.f32.gmra.mxu0 %v315
    %v334 = vpop.f32.mrf.mxu0
    %v335 = vadd.f32 %v150, %v334
    %336 = vdwg.mxu0
    %338 = vrot.lane.b32.xlu0 %v335, 80
    %v339 = vpop.permute.xlu0 %338
    %v341 = vsel %vm93, %v335, %v339
    %v342 = vadd.f32 %v109, %v341
    %v343 = vxor.u32 %v342, 2147483648
    %v344 = vmul.f32 %v343, 1.442695
    %v345 = vpow.pop %v344
    %v346 = vadd.f32 %v345, 1.0
    %v347 = vrcp.pop %v346
    %v348 = vmul.f32 %v346, %v347
    %v349 = vsub.f32 1.0, %v348
    %v350 = vmul.f32 %v347, %v349
    %v351 = vadd.f32 %v347, %v350
    %vm352 = vweird.f32 %v346
    %vm353 = vweird.f32 %v347
    %vm354 = vmor %vm352, %vm353
    %v355 = vsel %vm354, %v347, %v351
    %v356 = vand.u32 2147483647, %v346
    %vm357 = vcmp.eq.f32.partialorder %v356, 8.507059e+37
    %v358 = vand.u32 %v346, 2147483648
    %v359 = vor.u32 1.1754944e-38, %v358
    %v360 = vsel %vm357, %v359, %v355
    %v361 = vmul.f32 1.0, %v360
    %363 = vrot.lane.b32.xlu0 %v341, 96
    %v364 = vpop.permute.xlu0 %363
    %v366 = vmul.f32 %v361, %v364
    %368 = vrot.lane.b32.xlu0 %v366, 32
    %v369 = vpop.permute.xlu0 %368
    %v371 = vadd.f32 %v109, %v369
    %v372 = vtanh.pop %v371
    %v373 = vsub.f32 %v305, %v372
    %375 = vrot.lane.b32.xlu0 %v373, 112
    %v376 = vpop.permute.xlu0 %375
    %v378 = vmul.f32 %v361, %v376
    %380 = vrot.lane.b32.xlu0 %v378, 16
    %v381 = vpop.permute.xlu0 %380
    %v383 = vadd.f32 %v372, %v381
    %385 = vrot.lane.b32.xlu0 %v383, 96
    %v386 = vpop.permute.xlu0 %385
    %388 = vst.msk [vmem:[#allocation2 + $0x4] sm:$0x3] %vm230, %v386
    %389 = vrot.lane.b32.xlu0 %v383, 112
    %v390 = vpop.permute.xlu0 %389
    %392 = vst.msk [vmem:[#allocation2 + $0x8] sm:$0xc] %vm235, %v390
    %v393 = vsel %vm50, %v386, 0
    %395 = vmatpush.msra.mxu0 0.0
    %396 = vmatpush.msra.mxu0 0.0
    %397 = vmatpush.msra.mxu0 0.0
    %398 = vmatpush.msra.mxu0 0.0
    %399 = vmatpush.msra.mxu0 0.0
    %400 = vmatpush.msra.mxu0 0.0
    %401 = vmatpush.msra.mxu0 0.0
    %402 = vmatpush.msra.mxu0 0.0
    %403 = vmatpush.msra.mxu0 0.0
    %404 = vmatpush.msra.mxu0 0.0
    %405 = vmatpush.msra.mxu0 0.0
    %406 = vmatpush.msra.mxu0 0.0
    %407 = vmatpush.msra.mxu0 0.0
    %408 = vmatpush.msra.mxu0 0.0
    %409 = vmatpush.msra.mxu0 %v147
    %410 = vmatpush.msra.mxu0 %v146
    %411 = vmatmul.f32.gmra.mxu0 %v393
    %v412 = vpop.f32.mrf.mxu0
    %v413 = vadd.f32 %v150, %v412
    %414 = vdwg.mxu0
    %416 = vrot.lane.b32.xlu0 %v413, 80
    %v417 = vpop.permute.xlu0 %416
    %v419 = vsel %vm93, %v413, %v417
    %v420 = vadd.f32 %v115, %v419
    %v421 = vxor.u32 %v420, 2147483648
    %v422 = vmul.f32 %v421, 1.442695
    %v423 = vpow.pop %v422
    %v424 = vadd.f32 %v423, 1.0
    %v425 = vrcp.pop %v424
    %v426 = vmul.f32 %v424, %v425
    %v427 = vsub.f32 1.0, %v426
    %v428 = vmul.f32 %v425, %v427
    %v429 = vadd.f32 %v425, %v428
    %vm430 = vweird.f32 %v424
    %vm431 = vweird.f32 %v425
    %vm432 = vmor %vm430, %vm431
    %v433 = vsel %vm432, %v425, %v429
    %v434 = vand.u32 2147483647, %v424
    %vm435 = vcmp.eq.f32.partialorder %v434, 8.507059e+37
    %v436 = vand.u32 %v424, 2147483648
    %v437 = vor.u32 1.1754944e-38, %v436
    %v438 = vsel %vm435, %v437, %v433
    %v439 = vmul.f32 1.0, %v438
    %441 = vrot.lane.b32.xlu0 %v419, 96
    %v442 = vpop.permute.xlu0 %441
    %v444 = vmul.f32 %v439, %v442
    %446 = vrot.lane.b32.xlu0 %v444, 32
    %v447 = vpop.permute.xlu0 %446
    %v449 = vadd.f32 %v115, %v447
    %v450 = vtanh.pop %v449
    %v451 = vsub.f32 %v383, %v450
    %453 = vrot.lane.b32.xlu0 %v451, 112
    %v454 = vpop.permute.xlu0 %453
    %v456 = vmul.f32 %v439, %v454
    %458 = vrot.lane.b32.xlu0 %v456, 16
    %v459 = vpop.permute.xlu0 %458
    %v461 = vadd.f32 %v450, %v459
    %463 = vrot.lane.b32.xlu0 %v461, 96
    %v464 = vpop.permute.xlu0 %463
    %466 = vst.msk [vmem:[#allocation2 + $0x6] sm:$0x3] %vm230, %v464
    %467 = vrot.lane.b32.xlu0 %v461, 112
    %v468 = vpop.permute.xlu0 %467
    %470 = vst.msk [vmem:[#allocation2 + $0x6] sm:$0xc] %vm235, %v468
    %v471 = vsel %vm50, %v464, 0
    %473 = vmatpush.msra.mxu0 0.0
    %474 = vmatpush.msra.mxu0 0.0
    %475 = vmatpush.msra.mxu0 0.0
    %476 = vmatpush.msra.mxu0 0.0
    %477 = vmatpush.msra.mxu0 0.0
    %478 = vmatpush.msra.mxu0 0.0
    %479 = vmatpush.msra.mxu0 0.0
    %480 = vmatpush.msra.mxu0 0.0
    %481 = vmatpush.msra.mxu0 0.0
    %482 = vmatpush.msra.mxu0 0.0
    %483 = vmatpush.msra.mxu0 0.0
    %484 = vmatpush.msra.mxu0 0.0
    %485 = vmatpush.msra.mxu0 0.0
    %486 = vmatpush.msra.mxu0 0.0
    %487 = vmatpush.msra.mxu0 %v147
    %488 = vmatpush.msra.mxu0 %v146
    %489 = vmatmul.f32.gmra.mxu0 %v471
    %v490 = vpop.f32.mrf.mxu0
    %v491 = vadd.f32 %v150, %v490
    %492 = vdwg.mxu0
    %494 = vrot.lane.b32.xlu0 %v491, 80
    %v495 = vpop.permute.xlu0 %494
    %v497 = vsel %vm93, %v491, %v495
    %v498 = vadd.f32 %v120, %v497
    %v499 = vxor.u32 %v498, 2147483648
    %v500 = vmul.f32 %v499, 1.442695
    %v501 = vpow.pop %v500
    %v502 = vadd.f32 %v501, 1.0
    %v503 = vrcp.pop %v502
    %v504 = vmul.f32 %v502, %v503
    %v505 = vsub.f32 1.0, %v504
    %v506 = vmul.f32 %v503, %v505
    %v507 = vadd.f32 %v503, %v506
    %vm508 = vweird.f32 %v502
    %vm509 = vweird.f32 %v503
    %vm510 = vmor %vm508, %vm509
    %v511 = vsel %vm510, %v503, %v507
    %v512 = vand.u32 2147483647, %v502
    %vm513 = vcmp.eq.f32.partialorder %v512, 8.507059e+37
    %v514 = vand.u32 %v502, 2147483648
    %v515 = vor.u32 1.1754944e-38, %v514
    %v516 = vsel %vm513, %v515, %v511
    %v517 = vmul.f32 1.0, %v516
    %519 = vrot.lane.b32.xlu0 %v497, 96
    %v520 = vpop.permute.xlu0 %519
    %v522 = vmul.f32 %v517, %v520
    %524 = vrot.lane.b32.xlu0 %v522, 32
    %v525 = vpop.permute.xlu0 %524
    %v527 = vadd.f32 %v120, %v525
    %v528 = vtanh.pop %v527
    %v529 = vsub.f32 %v461, %v528
    %531 = vrot.lane.b32.xlu0 %v529, 112
    %v532 = vpop.permute.xlu0 %531
    %v534 = vmul.f32 %v517, %v532
    %536 = vrot.lane.b32.xlu0 %v534, 16
    %v537 = vpop.permute.xlu0 %536
    %v539 = vadd.f32 %v528, %v537
    %541 = vrot.lane.b32.xlu0 %v539, 96
    %v542 = vpop.permute.xlu0 %541
    %544 = vst.msk [vmem:[#allocation2 + $0x8] sm:$0x3] %vm230, %v542
    %545 = vrot.lane.b32.xlu0 %v539, 112
    %v546 = vpop.permute.xlu0 %545
    %548 = vst.msk [vmem:[#allocation2 + $0x4] sm:$0xc] %vm235, %v546
    %v549 = vsel %vm50, %v542, 0
    %551 = vmatpush.msra.mxu0 0.0
    %552 = vmatpush.msra.mxu0 0.0
    %553 = vmatpush.msra.mxu0 0.0
    %554 = vmatpush.msra.mxu0 0.0
    %555 = vmatpush.msra.mxu0 0.0
    %556 = vmatpush.msra.mxu0 0.0
    %557 = vmatpush.msra.mxu0 0.0
    %558 = vmatpush.msra.mxu0 0.0
    %559 = vmatpush.msra.mxu0 0.0
    %560 = vmatpush.msra.mxu0 0.0
    %561 = vmatpush.msra.mxu0 0.0
    %562 = vmatpush.msra.mxu0 0.0
    %563 = vmatpush.msra.mxu0 0.0
    %564 = vmatpush.msra.mxu0 0.0
    %565 = vmatpush.msra.mxu0 %v147
    %566 = vmatpush.msra.mxu0 %v146
    %567 = vmatmul.f32.gmra.mxu0 %v549
    %v568 = vpop.f32.mrf.mxu0
    %v569 = vadd.f32 %v150, %v568
    %570 = vdwg.mxu0
    %572 = vrot.lane.b32.xlu0 %v569, 80
    %v573 = vpop.permute.xlu0 %572
    %v575 = vsel %vm93, %v569, %v573
    %v576 = vadd.f32 %v126, %v575
    %v577 = vxor.u32 %v576, 2147483648
    %v578 = vmul.f32 %v577, 1.442695
    %v579 = vpow.pop %v578
    %v580 = vadd.f32 %v579, 1.0
    %v581 = vrcp.pop %v580
    %v582 = vmul.f32 %v580, %v581
    %v583 = vsub.f32 1.0, %v582
    %v584 = vmul.f32 %v581, %v583
    %v585 = vadd.f32 %v581, %v584
    %vm586 = vweird.f32 %v580
    %vm587 = vweird.f32 %v581
    %vm588 = vmor %vm586, %vm587
    %v589 = vsel %vm588, %v581, %v585
    %v590 = vand.u32 2147483647, %v580
    %vm591 = vcmp.eq.f32.partialorder %v590, 8.507059e+37
    %v592 = vand.u32 %v580, 2147483648
    %v593 = vor.u32 1.1754944e-38, %v592
    %v594 = vsel %vm591, %v593, %v589
    %v595 = vmul.f32 1.0, %v594
    %597 = vrot.lane.b32.xlu0 %v575, 96
    %v598 = vpop.permute.xlu0 %597
    %v600 = vmul.f32 %v595, %v598
    %602 = vrot.lane.b32.xlu0 %v600, 32
    %v603 = vpop.permute.xlu0 %602
    %v605 = vadd.f32 %v126, %v603
    %v606 = vtanh.pop %v605
    %v607 = vsub.f32 %v539, %v606
    %609 = vrot.lane.b32.xlu0 %v607, 112
    %v610 = vpop.permute.xlu0 %609
    %v612 = vmul.f32 %v595, %v610
    %614 = vrot.lane.b32.xlu0 %v612, 16
    %v615 = vpop.permute.xlu0 %614
    %v617 = vadd.f32 %v606, %v615
    %619 = vrot.lane.b32.xlu0 %v617, 96
    %v620 = vpop.permute.xlu0 %619
    %622 = vst.msk [vmem:[#allocation2 + $0xa] sm:$0x3] %vm230, %v620
    %623 = vrot.lane.b32.xlu0 %v617, 112
    %v624 = vpop.permute.xlu0 %623
    %626 = vst.msk [vmem:[#allocation2 + $0x2] sm:$0xc] %vm235, %v624
    %v627 = vsel %vm50, %v620, 0
    %629 = vmatpush.msra.mxu0 0.0
    %630 = vmatpush.msra.mxu0 0.0
    %631 = vmatpush.msra.mxu0 0.0
    %632 = vmatpush.msra.mxu0 0.0
    %633 = vmatpush.msra.mxu0 0.0
    %634 = vmatpush.msra.mxu0 0.0
    %635 = vmatpush.msra.mxu0 0.0
    %636 = vmatpush.msra.mxu0 0.0
    %637 = vmatpush.msra.mxu0 0.0
    %638 = vmatpush.msra.mxu0 0.0
    %639 = vmatpush.msra.mxu0 0.0
    %640 = vmatpush.msra.mxu0 0.0
    %641 = vmatpush.msra.mxu0 0.0
    %642 = vmatpush.msra.mxu0 0.0
    %643 = vmatpush.msra.mxu0 %v147
    %644 = vmatpush.msra.mxu0 %v146
    %645 = vmatmul.f32.gmra.mxu0 %v627
    %v646 = vpop.f32.mrf.mxu0
    %v647 = vadd.f32 %v150, %v646
    %648 = vdwg.mxu0
    %650 = vrot.lane.b32.xlu0 %v647, 80
    %v651 = vpop.permute.xlu0 %650
    %v653 = vsel %vm93, %v647, %v651
    %v654 = vadd.f32 %v131, %v653
    %v655 = vxor.u32 %v654, 2147483648
    %v656 = vmul.f32 %v655, 1.442695
    %v657 = vpow.pop %v656
    %v658 = vadd.f32 %v657, 1.0
    %v659 = vrcp.pop %v658
    %v660 = vmul.f32 %v658, %v659
    %v661 = vsub.f32 1.0, %v660
    %v662 = vmul.f32 %v659, %v661
    %v663 = vadd.f32 %v659, %v662
    %vm664 = vweird.f32 %v658
    %vm665 = vweird.f32 %v659
    %vm666 = vmor %vm664, %vm665
    %v667 = vsel %vm666, %v659, %v663
    %v668 = vand.u32 2147483647, %v658
    %vm669 = vcmp.eq.f32.partialorder %v668, 8.507059e+37
    %v670 = vand.u32 %v658, 2147483648
    %v671 = vor.u32 1.1754944e-38, %v670
    %v672 = vsel %vm669, %v671, %v667
    %v673 = vmul.f32 1.0, %v672
    %675 = vrot.lane.b32.xlu0 %v653, 96
    %v676 = vpop.permute.xlu0 %675
    %v678 = vmul.f32 %v673, %v676
    %680 = vrot.lane.b32.xlu0 %v678, 32
    %v681 = vpop.permute.xlu0 %680
    %v683 = vadd.f32 %v131, %v681
    %v684 = vtanh.pop %v683
    %v685 = vsub.f32 %v617, %v684
    %687 = vrot.lane.b32.xlu0 %v685, 112
    %v688 = vpop.permute.xlu0 %687
    %v690 = vmul.f32 %v673, %v688
    %692 = vrot.lane.b32.xlu0 %v690, 16
    %v693 = vpop.permute.xlu0 %692
    %v695 = vadd.f32 %v684, %v693
    %697 = vrot.lane.b32.xlu0 %v695, 96
    %v698 = vpop.permute.xlu0 %697
    %700 = vst.msk [vmem:[#allocation2 + $0xc] sm:$0x3] %vm230, %v698
    %701 = vrot.lane.b32.xlu0 %v695, 112
    %v702 = vpop.permute.xlu0 %701
    %704 = vst.msk [vmem:[#allocation2] sm:$0xc] %vm235, %v702
    %v705 = vsel %vm50, %v698, 0
    %707 = vmatpush.msra.mxu0 0.0
    %708 = vmatpush.msra.mxu0 0.0
    %709 = vmatpush.msra.mxu0 0.0
    %710 = vmatpush.msra.mxu0 0.0
    %711 = vmatpush.msra.mxu0 0.0
    %712 = vmatpush.msra.mxu0 0.0
    %713 = vmatpush.msra.mxu0 0.0
    %714 = vmatpush.msra.mxu0 0.0
    %715 = vmatpush.msra.mxu0 0.0
    %716 = vmatpush.msra.mxu0 0.0
    %717 = vmatpush.msra.mxu0 0.0
    %718 = vmatpush.msra.mxu0 0.0
    %719 = vmatpush.msra.mxu0 0.0
    %720 = vmatpush.msra.mxu0 0.0
    %721 = vmatpush.msra.mxu0 %v147
    %722 = vmatpush.msra.mxu0 %v146
    %723 = vmatmul.f32.gmra.mxu0 %v705
    %v724 = vpop.f32.mrf.mxu0
    %v725 = vadd.f32 %v150, %v724
    %726 = vdwg.mxu0
    %728 = vrot.lane.b32.xlu0 %v725, 80
    %v729 = vpop.permute.xlu0 %728
    %v731 = vsel %vm93, %v725, %v729
    %v732 = vadd.f32 %v137, %v731
    %v733 = vxor.u32 %v732, 2147483648
    %v734 = vmul.f32 %v733, 1.442695
    %v735 = vpow.pop %v734
    %v736 = vadd.f32 %v735, 1.0
    %v737 = vrcp.pop %v736
    %v738 = vmul.f32 %v736, %v737
    %v739 = vsub.f32 1.0, %v738
    %v740 = vmul.f32 %v737, %v739
    %v741 = vadd.f32 %v737, %v740
    %vm742 = vweird.f32 %v736
    %vm743 = vweird.f32 %v737
    %vm744 = vmor %vm742, %vm743
    %v745 = vsel %vm744, %v737, %v741
    %v746 = vand.u32 2147483647, %v736
    %vm747 = vcmp.eq.f32.partialorder %v746, 8.507059e+37
    %v748 = vand.u32 %v736, 2147483648
    %v749 = vor.u32 1.1754944e-38, %v748
    %v750 = vsel %vm747, %v749, %v745
    %v751 = vmul.f32 1.0, %v750
    %753 = vrot.lane.b32.xlu0 %v731, 96
    %v754 = vpop.permute.xlu0 %753
    %v756 = vmul.f32 %v751, %v754
    %758 = vrot.lane.b32.xlu0 %v756, 32
    %v759 = vpop.permute.xlu0 %758
    %v761 = vadd.f32 %v137, %v759
    %v762 = vtanh.pop %v761
    %v763 = vsub.f32 %v695, %v762
    %765 = vrot.lane.b32.xlu0 %v763, 112
    %v766 = vpop.permute.xlu0 %765
    %v768 = vmul.f32 %v751, %v766
    %770 = vrot.lane.b32.xlu0 %v768, 16
    %v771 = vpop.permute.xlu0 %770
    %v773 = vadd.f32 %v762, %v771
    %775 = vrot.lane.b32.xlu0 %v773, 96
    %v776 = vpop.permute.xlu0 %775
    %778 = vst.msk [vmem:[#allocation2 + $0xe] sm:$0x3] %vm230, %v776
    %779 = vrot.lane.b32.xlu0 %v773, 112
    %v780 = vpop.permute.xlu0 %779
    %782 = vst.msk [vmem:[#allocation2 - $0x2] sm:$0xc] %vm235, %v780
    %783 = vst.msk [vmem:[#allocation5] sm:$0x3] %vm230, %v776
    %s784 = scalar_lea.vmem [#allocation5], 2
    %vm785 = vcmask 125954
    %786 = vst.msk [vmem:[%s784 - $0x2] sm:$0xc] %vm785, %v776
    %v787 = vld [vmem:[#allocation2] sm:$0xff]
    %v788 = vld [vmem:[#allocation2 + $0x8] sm:$0xff]
    %v789 = vld [vmem:[%s6] sm:$0xff]
    %v790 = vld [vmem:[%s6 + $0x8] sm:$0xff]
    %v791 = vld [vmem:[%s6 + $0x10] sm:$0xff]
    %v792 = vld [vmem:[%s6 + $0x18] sm:$0xff]
    %v793 = vld [vmem:[%s7] sm:$0x1]
    %v795 = vperm.slane %v793, 0
    %vm797 = vcmask 261120
    %v799 = vsel %vm797, %v787, 0
    %v802 = vsel %vm797, %v788, 0
    %804 = vmatpush.msra.mxu0 0.0
    %805 = vmatpush.msra.mxu0 0.0
    %806 = vmatpush.msra.mxu0 0.0
    %807 = vmatpush.msra.mxu0 0.0
    %808 = vmatpush.msra.mxu0 0.0
    %809 = vmatpush.msra.mxu0 0.0
    %810 = vmatpush.msra.mxu0 0.0
    %811 = vmatpush.msra.mxu0 0.0
    %812 = vmatpush.msra.mxu0 0.0
    %813 = vmatpush.msra.mxu0 0.0
    %814 = vmatpush.msra.mxu0 0.0
    %815 = vmatpush.msra.mxu0 0.0
    %816 = vmatpush.msra.mxu0 %v792
    %817 = vmatpush.msra.mxu0 %v791
    %818 = vmatpush.msra.mxu0 %v790
    %819 = vmatpush.msra.mxu0 %v789
    %820 = vmatmul.f32.gmra.mxu0 %v799
    %v821 = vpop.f32.mrf.mxu0
    %v822 = vadd.f32 %v795, %v821
    %823 = vmatmul.f32.gmra.mxu0 %v802
    %v824 = vpop.f32.mrf.mxu0
    %v825 = vadd.f32 %v795, %v824
    %826 = vdwg.mxu0
    %v827 = vtanh.pop %v822
    %v828 = vtanh.pop %v825
    %v829 = vld [vmem:[%s8] sm:$0xff]
    %v830 = vld [vmem:[%s8 + $0x8] sm:$0xff]
    %v831 = vld [vmem:[%s8 + $0x10] sm:$0xff]
    %v832 = vld [vmem:[%s8 + $0x18] sm:$0xff]
    %v834 = vsel %vm797, %v827, 0
    %v837 = vsel %vm797, %v828, 0
    %839 = vmatpush.msra.mxu0 0.0
    %840 = vmatpush.msra.mxu0 0.0
    %841 = vmatpush.msra.mxu0 0.0
    %842 = vmatpush.msra.mxu0 0.0
    %843 = vmatpush.msra.mxu0 0.0
    %844 = vmatpush.msra.mxu0 0.0
    %845 = vmatpush.msra.mxu0 0.0
    %846 = vmatpush.msra.mxu0 0.0
    %847 = vmatpush.msra.mxu0 0.0
    %848 = vmatpush.msra.mxu0 0.0
    %849 = vmatpush.msra.mxu0 0.0
    %850 = vmatpush.msra.mxu0 0.0
    %851 = vmatpush.msra.mxu0 %v832
    %852 = vmatpush.msra.mxu0 %v831
    %853 = vmatpush.msra.mxu0 %v830
    %854 = vmatpush.msra.mxu0 %v829
    %855 = vmatmul.f32.gmra.mxu0 %v834
    %v856 = vpop.f32.mrf.mxu0
    %v857 = vadd.f32 0.0, %v856
    %858 = vmatmul.f32.gmra.mxu0 %v837
    %v859 = vpop.f32.mrf.mxu0
    %v860 = vadd.f32 0.0, %v859
    %861 = vdwg.mxu0
    %vm862 = vcmask 7168
    %v863 = vsel %vm862, %v857, -inf
    %v864 = vsel %vm862, %v860, -inf
    %v865 = vmax.f32 %v863, %v864
    %v866 = vrot.slane %v865, 4
    %v867 = vmax.f32 %v865, %v866
    %v868 = vrot.slane %v867, 2
    %v869 = vmax.f32 %v867, %v868
    %v870 = vrot.slane %v869, 1
    %v871 = vmax.f32 %v869, %v870
    %v872 = vsub.f32 %v857, %v871
    %v873 = vsub.f32 %v860, %v871
    %v874 = vmul.f32 %v872, 1.442695
    %v875 = vpow.pop %v874
    %v876 = vmul.f32 %v873, 1.442695
    %v877 = vpow.pop %v876
    %v878 = vlaneseq
    %v879 = vand.u32 %v878, 127
    %vm880 = vcmp.eq.s32.totalorder %v38, %v879
    %v881 = vsel %vm880, 1, 0
    %v882 = vcvt.s32.f32 %v881
    %884 = vrot.lane.b32.xlu0 %v882, 2
    %v885 = vpop.permute.xlu0 %884
    %887 = vrot.lane.b32.xlu0 %v882, 4
    %v888 = vpop.permute.xlu0 %887
    %890 = vrot.lane.b32.xlu0 %v882, 6
    %v891 = vpop.permute.xlu0 %890
    %893 = vrot.lane.b32.xlu0 %v882, 8
    %v894 = vpop.permute.xlu0 %893
    %896 = vrot.lane.b32.xlu0 %v882, 10
    %v897 = vpop.permute.xlu0 %896
    %899 = vrot.lane.b32.xlu0 %v882, 12
    %v900 = vpop.permute.xlu0 %899
    %902 = vrot.lane.b32.xlu0 %v882, 14
    %v903 = vpop.permute.xlu0 %902
    %vm905 = vcmask 15360
    %v906 = vsel %vm905, %v882, %v885
    %vm907 = vcmask 31744
    %v908 = vsel %vm907, %v906, %v888
    %vm909 = vcmask 48128
    %v910 = vsel %vm909, %v908, %v891
    %vm911 = vcmask 64512
    %v912 = vsel %vm911, %v910, %v894
    %vm913 = vcmask 80896
    %v914 = vsel %vm913, %v912, %v897
    %vm915 = vcmask 97280
    %v916 = vsel %vm915, %v914, %v900
    %vm917 = vcmask 113664
    %v918 = vsel %vm917, %v916, %v903
    %v919 = vadd.s32 %v38, 8
    %v920 = vmul.u32 %v879, 2
    %vm921 = vcmp.ge.s32.totalorder %v38, %v920
    %vm922 = vcmp.ge.s32.totalorder %v919, %v920
    %v923 = vadd.s32 %v879, 1
    %v924 = vmul.u32 %v923, 2
    %vm925 = vcmp.lt.s32.totalorder %v38, %v924
    %vm926 = vcmp.lt.s32.totalorder %v919, %v924
    %vm927 = vmand %vm921, %vm925
    %vm928 = vmand %vm922, %vm926
    %v929 = vsel %vm927, 1, 0
    %v930 = vsel %vm928, 1, 0
    %v931 = vcvt.s32.f32 %v929
    %v932 = vcvt.s32.f32 %v930
    %934 = vset.pattern.permute.xlu0 0
    %935 = vperm.xlu0 %934, %v875
    %v936 = vpop.permute.xlu0 %935
    %939 = vset.pattern.permute.xlu0 0
    %940 = vperm.xlu0 %939, %v877
    %v941 = vpop.permute.xlu0 %940
    %v943 = vmul.f32 %v936, %v931
    %v944 = vmul.f32 %v941, %v932
    %v946 = vsel %vm50, %v918, 0
    %948 = vmatpush.msra.mxu0 0.0
    %949 = vmatpush.msra.mxu0 0.0
    %950 = vmatpush.msra.mxu0 0.0
    %951 = vmatpush.msra.mxu0 0.0
    %952 = vmatpush.msra.mxu0 0.0
    %953 = vmatpush.msra.mxu0 0.0
    %954 = vmatpush.msra.mxu0 0.0
    %955 = vmatpush.msra.mxu0 0.0
    %956 = vmatpush.msra.mxu0 0.0
    %957 = vmatpush.msra.mxu0 0.0
    %958 = vmatpush.msra.mxu0 0.0
    %959 = vmatpush.msra.mxu0 0.0
    %960 = vmatpush.msra.mxu0 0.0
    %961 = vmatpush.msra.mxu0 0.0
    %962 = vmatpush.msra.mxu0 %v944
    %963 = vmatpush.msra.mxu0 %v943
    %964 = vmatmul.f32.gmra.mxu0 %v946
    %v965 = vpop.f32.mrf.mxu0
    %v966 = vadd.f32 0.0, %v965
    %967 = vdwg.mxu0
    %v968 = vmul.f32 %v936, %v787
    %v969 = vmul.f32 %v941, %v788
    %970 = vmatpush.msra.mxu0 0.0
    %971 = vmatpush.msra.mxu0 0.0
    %972 = vmatpush.msra.mxu0 0.0
    %973 = vmatpush.msra.mxu0 0.0
    %974 = vmatpush.msra.mxu0 0.0
    %975 = vmatpush.msra.mxu0 0.0
    %976 = vmatpush.msra.mxu0 0.0
    %977 = vmatpush.msra.mxu0 0.0
    %978 = vmatpush.msra.mxu0 0.0
    %979 = vmatpush.msra.mxu0 0.0
    %980 = vmatpush.msra.mxu0 0.0
    %981 = vmatpush.msra.mxu0 0.0
    %982 = vmatpush.msra.mxu0 0.0
    %983 = vmatpush.msra.mxu0 0.0
    %984 = vmatpush.msra.mxu0 %v969
    %985 = vmatpush.msra.mxu0 %v968
    %986 = vmatmul.f32.gmra.mxu0 %v946
    %v987 = vpop.f32.mrf.mxu0
    %v988 = vadd.f32 0.0, %v987
    %989 = vdwg.mxu0
    %vm990 = vcmask 58368
    %v991 = vsel %vm990, %v966, 0.0
    %992 = vadd.xlane.f32.xlu0 %v991
    %v993 = vpop.xlane.xlu0 %992
    %v994 = vrcp.pop %v993
    %v995 = vmul.f32 %v966, %v994
    %996 = vst.msk [vmem:[#allocation7] sm:$0x3] %vm990, %v995
    %v997 = vmul.f32 %v988, %v994
    %vm998 = vcmask 254976
    %999 = vst.msk [vmem:[#allocation3] sm:$0x3] %vm998, %v997
    // Predicated region
    $region38: #{attention_word_rnn_forward.1} parent=1 // pred_check
      _
    $region39: #{attention_word_rnn_forward.1} parent=1 // pred_check_branch
      %1001 = sbr.rel (0) target = $region41
    $region40: #{attention_word_rnn_forward.1} parent=1 // pred_region
      %1003 = vsyncadd [#allocation4], 0
      %s1005 = sshll.u32 [#allocation3], 4
      %s1006 = int_to_ptr.vmem [resolvable:$true] %s1005
      %s1007 = sshll.u32 %s9, 4
      %s1008 = int_to_ptr.hbm [resolvable:$true] %s1007
      %1010 = dma.vmem_to_hbm [thread:$0]  %s1006, 32, %s1008, [#allocation4]
    $region41: #{attention_word_rnn_forward.1} parent=1 // pred_fallthru
      _
    // Predicated region
    $region42: #{attention_word_rnn_forward.1} parent=1 // pred_check
      _
    $region43: #{attention_word_rnn_forward.1} parent=1 // pred_check_branch
      %1012 = sbr.rel (0) target = $region45
    $region44: #{attention_word_rnn_forward.1} parent=1 // pred_region
      %1014 = vsyncadd [#allocation6], 0
      %s1015 = sshll.u32 [#allocation5], 4
      %s1016 = int_to_ptr.vmem [resolvable:$true] %s1015
      %s1017 = sshll.u32 %s10, 4
      %s1018 = int_to_ptr.hbm [resolvable:$true] %s1017
      %1023 = dma.vmem_to_hbm [thread:$0]  %s1016, 64, %s1018, [#allocation6], 32, 32, 2
    $region45: #{attention_word_rnn_forward.1} parent=1 // pred_fallthru
      _
    // Predicated region
    $region46: #{attention_word_rnn_forward.1} parent=1 // pred_check
      _
    $region47: #{attention_word_rnn_forward.1} parent=1 // pred_check_branch
      %1025 = sbr.rel (0) target = $region49
    $region48: #{attention_word_rnn_forward.1} parent=1 // pred_region
      %1027 = vsyncadd [#allocation6], 0
      %s1029 = sshll.u32 [#allocation7], 4
      %s1030 = int_to_ptr.vmem [resolvable:$true] %s1029
      %s1031 = sshll.u32 %s11, 4
      %s1032 = int_to_ptr.hbm [resolvable:$true] %s1031
      %1034 = dma.vmem_to_hbm [thread:$0]  %s1030, 32, %s1032, [#allocation6]
    $region49: #{attention_word_rnn_forward.1} parent=1 // pred_fallthru
      _
    // Predicated region
    $region50: #{attention_word_rnn_forward.1} parent=1 // pred_check
      _
    $region51: #{attention_word_rnn_forward.1} parent=1 // pred_check_branch
      %1036 = sbr.rel (0) target = $region53
    $region52: #{attention_word_rnn_forward.1} parent=1 // pred_region
      %1038 = dma.done [#allocation4], 32
    $region53: #{attention_word_rnn_forward.1} parent=1 // pred_fallthru
      _
    // Predicated region
    $region54: #{attention_word_rnn_forward.1} parent=1 // pred_check
      _
    $region55: #{attention_word_rnn_forward.1} parent=1 // pred_check_branch
      %1040 = sbr.rel (0) target = $region57
    $region56: #{attention_word_rnn_forward.1} parent=1 // pred_region
      %1042 = dma.done [#allocation6], 64
    $region57: #{attention_word_rnn_forward.1} parent=1 // pred_fallthru
      _
    // Predicated region
    $region58: #{attention_word_rnn_forward.1} parent=1 // pred_check
      _
    $region59: #{attention_word_rnn_forward.1} parent=1 // pred_check_branch
      %1044 = sbr.rel (0) target = $region61
    $region60: #{attention_word_rnn_forward.1} parent=1 // pred_region
      %1046 = dma.done [#allocation6], 32
    $region61: #{attention_word_rnn_forward.1} parent=1 // pred_fallthru
      _
    %1047 = vsyncpa [#allocation4], 1
    %1048 = vsyncpa [#allocation6], 1

</llo_original>
